<compile_context>
chip_gen: v7x
topology: tpu7x:2x2x1
jax: 0.10.0
libtpu: 0.0.40
codegen_flags: <defaults>
</compile_context>

<pallas_src>
import functools

import jax
import jax.numpy as jnp
import numpy as np
from jax import lax
from jax.experimental import pallas as pl
from jax.experimental.pallas import tpu as pltpu


# ---------------------------------------------------------------------------
# The fused decoder kernel (one grid step per batch tile; activations stay VMEM/vreg resident)
# ---------------------------------------------------------------------------
def _decoder_kernel(*refs, num_res, num_up, seg_len):
    x_ref = refs[0]
    o_ref = refs[-1]
    it = iter(refs[1:-1])

    N = x_ref.shape[-1]                       # folded lane width = batch_tile * seg_len

    # Per-batch-segment boundary masks, built ONCE (hoisted out of all tap loops).
    col = lax.broadcasted_iota(jnp.int32, (1, N), 1)
    not_first = (col % seg_len) != 0                    # position t-1 stays inside the segment
    not_last = (col % seg_len) != (seg_len - 1)         # position t+1 stays inside the segment

    def shift_r(v):
        # y[:, t] = v[:, t-1]; zero where t-1 falls outside the batch segment (conv padding).
        z = jnp.zeros((v.shape[0], 1), jnp.float32)
        return jnp.where(not_first, jnp.concatenate([z, v[:, :-1]], axis=1), 0.0)

    def shift_l(v):
        # y[:, t] = v[:, t+1]; zero where t+1 falls outside the batch segment.
        z = jnp.zeros((v.shape[0], 1), jnp.float32)
        return jnp.where(not_last, jnp.concatenate([v[:, 1:], z], axis=1), 0.0)

    def mm(w_ref, operand):
        # bf16 (or f32) operands, f32 accumulation on the MXU.
        return jnp.dot(w_ref[...], operand.astype(w_ref.dtype),
                       preferred_element_type=jnp.float32)

    def conv3(v, w_ref, b_ref):
        # k=3, pad=1 conv as ONE matmul: im2col operand (3*Cin, N) vs weight (Cout, 3*Cin).
        op = jnp.concatenate([shift_r(v), v, shift_l(v)], axis=0)
        return mm(w_ref, op) + b_ref[...]

    # ---- stem conv --------------------------------------------------------
    x = x_ref[...].astype(jnp.float32)                  # (Cin, N), time/batch on lanes
    cw, cb = next(it), next(it)
    h = conv3(x, cw, cb)

    # ---- residual stack (fused residual adds, f32 elementwise) ------------
    for _ in range(num_res):
        w3, b3, w1, b1 = next(it), next(it), next(it), next(it)
        t = jnp.maximum(conv3(jnp.maximum(h, 0.0), w3, b3), 0.0)
        h = h + mm(w1, t) + b1[...]
    h = jnp.maximum(h, 0.0)

    # ---- upsampling chain: polyphase ConvTranspose1d (k=4, s=2, p=1) ------
    # phases[r][:, b*L + m]  ==  activation at time  m * len(phases) + r  of segment b.
    phases = [h]
    for u in range(num_up):
        we, wo, bu = next(it), next(it), next(it)        # we=[W1|W3], wo=[W2|W0], bias
        P = len(phases)
        new_phases = [None] * (2 * P)
        for r in range(P):
            cur = phases[r]
            prev = phases[r - 1] if r > 0 else shift_r(phases[P - 1])   # x[s-1]
            nxt = phases[r + 1] if r < P - 1 else shift_l(phases[0])    # x[s+1]
            ev = mm(we, jnp.concatenate([cur, prev], axis=0)) + bu[...]  # out[2s]
            od = mm(wo, jnp.concatenate([cur, nxt], axis=0)) + bu[...]   # out[2s+1]
            if u < num_up - 1:                                           # ReLU except last layer
                ev = jnp.maximum(ev, 0.0)
                od = jnp.maximum(od, 0.0)
            new_phases[2 * r] = ev
            new_phases[2 * r + 1] = od
        phases = new_phases

    # Lane-dense store: phases concatenated along lanes, (Cout_final, 2^num_up * N).
    o_ref[0] = jnp.concatenate(phases, axis=-1).astype(o_ref.dtype)


# ---------------------------------------------------------------------------
# One-time parameter preparation (hoisted out of the forward pass)
# ---------------------------------------------------------------------------
def prepare_decoder_params(params, compute_dtype=jnp.bfloat16):
    """Pack weights for the kernel. Conv k=3 -> (Cout, 3*Cin) tap-major; ConvTranspose k=4 ->
    even/odd polyphase matrices (Cout, 2*Cin). GEMM operands cast to compute_dtype; biases
    stay f32 column vectors."""
    cd = compute_dtype

    def conv3_w(w):   # (Cout, Cin, 3) -> (Cout, 3*Cin), block k holds tap k
        return jnp.transpose(w, (0, 2, 1)).reshape(w.shape[0], -1).astype(cd)

    prepped = {
        "conv_w": conv3_w(params["conv_w"]),
        "conv_b": params["conv_b"].reshape(-1, 1).astype(jnp.float32),
        "res": [],
        "up": [],
    }
    for (w3, b3, w1, b1) in params["res"]:
        prepped["res"].append((
            conv3_w(w3), b3.reshape(-1, 1).astype(jnp.float32),
            w1[:, :, 0].astype(cd), b1.reshape(-1, 1).astype(jnp.float32),
        ))
    for (w, b) in params["up"]:
        wt = jnp.transpose(w, (1, 2, 0))                               # (Cout, 4, Cin)
        we = jnp.concatenate([wt[:, 1], wt[:, 3]], axis=-1).astype(cd)  # even: [W1 | W3]
        wo = jnp.concatenate([wt[:, 2], wt[:, 0]], axis=-1).astype(cd)  # odd : [W2 | W0]
        prepped["up"].append((we, wo, b.reshape(-1, 1).astype(jnp.float32)))
    return prepped


def _pick_batch_tile(B, L):
    # Smallest divisor of B whose folded lane width is a multiple of 128 (keeps >=2 parallel
    # grid steps on v7x for large B); otherwise fold the whole batch into one wide block.
    for bt in range(1, B + 1):
        if B % bt == 0 and (bt * L) % 128 == 0:
            return bt
    return B


# ---------------------------------------------------------------------------
# Forward: a single pallas_call for the whole decoder
# ---------------------------------------------------------------------------
def decoder_forward(prepped, x, batch_tile=None):
    B, Cin, L = x.shape
    num_res = len(prepped["res"])
    num_up = len(prepped["up"])
    P = 2 ** num_up
    Cout = prepped["up"][-1][0].shape[0]

    bt = batch_tile if batch_tile is not None else _pick_batch_tile(B, L)
    nt = B // bt
    n_lane = bt * L

    # Layout plumbing (outside the kernel): fold batch into the lane axis.
    xk = jnp.transpose(x, (1, 0, 2)).reshape(Cin, B * L)

    weights = [prepped["conv_w"], prepped["conv_b"]]
    for tpl in prepped["res"]:
        weights.extend(tpl)
    for tpl in prepped["up"]:
        weights.extend(tpl)

    def _wspec(a):
        nd = a.ndim
        # Constant across the grid -> single-buffered (saves VMEM, esp. on v7x).
        return pl.BlockSpec(a.shape, lambda i, nd=nd: (0,) * nd,
                            pipeline_mode=pl.Buffered(1))

    kernel = functools.partial(_decoder_kernel, num_res=num_res, num_up=num_up, seg_len=L)

    out = pl.pallas_call(
        kernel,
        out_shape=jax.ShapeDtypeStruct((nt, Cout, P * n_lane), jnp.float32),
        grid=(nt,),
        in_specs=[pl.BlockSpec((Cin, n_lane), lambda i: (0, i))] + [_wspec(w) for w in weights],
        out_specs=pl.BlockSpec((1, Cout, P * n_lane), lambda i: (i, 0, 0)),
        compiler_params=pltpu.CompilerParams(
            dimension_semantics=("parallel",),
            vmem_limit_bytes=48 * 1024 * 1024),
    )(xk, *weights)

    # De-phase / un-fold in the wrapper: (nt, Cout, P, bt, L) -> (B, Cout, L*P).
    out = out.reshape(nt, Cout, P, bt, L)
    out = jnp.transpose(out, (0, 3, 1, 4, 2)).reshape(B, Cout, L * P)
    return out


# ---------------------------------------------------------------------------
# Parameter init (mirrors the PyTorch module shapes)
# ---------------------------------------------------------------------------
def init_decoder_params(key, embedding_dim, num_hiddens, num_upsampling_layers,
                        num_residual_layers, num_residual_hiddens):
    keys = iter(jax.random.split(key, 4 + 4 * num_residual_layers + 2 * num_upsampling_layers))

    def rnd(shape, scale=0.1):
        return scale * jax.random.normal(next(keys), shape, jnp.float32)

    params = {
        "conv_w": rnd((num_hiddens, embedding_dim, 3)),
        "conv_b": rnd((num_hiddens,)),
        "res": [],
        "up": [],
    }
    for _ in range(num_residual_layers):
        params["res"].append((
            rnd((num_residual_hiddens, num_hiddens, 3)),   # Conv1d k=3 weight
            rnd((num_residual_hiddens,)),
            rnd((num_hiddens, num_residual_hiddens, 1)),   # Conv1d k=1 weight
            rnd((num_hiddens,)),
        ))
    for i in range(num_upsampling_layers):
        if i < num_upsampling_layers - 2:
            cin, cout = num_hiddens, num_hiddens
        elif i == num_upsampling_layers - 2:
            cin, cout = num_hiddens, num_hiddens // 2
        else:
            cin, cout = num_hiddens // 2, 1
        params["up"].append((rnd((cin, cout, 4)), rnd((cout,))))
    return params


# ---------------------------------------------------------------------------
# Pure-JAX (lax) reference for correctness checks
# ---------------------------------------------------------------------------
def decoder_reference(params, x):
    dn = ("NCH", "OIH", "NCH")

    def conv(x, w, b, pad):
        y = lax.conv_general_dilated(x, w, (1,), [(pad, pad)], dimension_numbers=dn)
        return y + b[None, :, None]

    def convT(x, w, b, stride, pad):
        Kw = w.shape[-1]
        w_eq = jnp.flip(jnp.transpose(w, (1, 0, 2)), axis=-1)
        y = lax.conv_general_dilated(x, w_eq, (1,), [(Kw - 1 - pad, Kw - 1 - pad)],
                                     lhs_dilation=(stride,), dimension_numbers=dn)
        return y + b[None, :, None]

    h = conv(x, params["conv_w"], params["conv_b"], 1)
    for (w3, b3, w1, b1) in params["res"]:
        t = jax.nn.relu(conv(jax.nn.relu(h), w3, b3, 1))
        t = conv(t, w1, b1, 0)
        h = h + t
    h = jax.nn.relu(h)
    n_up = len(params["up"])
    for li, (w, b) in enumerate(params["up"]):
        h = convT(h, w, b, 2, 1)
        if li < n_up - 1:
            h = jax.nn.relu(h)
    return h


if __name__ == "__main__":
    embedding_dim = 8
    num_hiddens = 32
    num_upsampling_layers = 3
    num_residual_layers = 2
    num_residual_hiddens = 16
    B, L = 2, 8

    key = jax.random.PRNGKey(0)
    kparam, kx = jax.random.split(key)
    params = init_decoder_params(kparam, embedding_dim, num_hiddens,
                                 num_upsampling_layers, num_residual_layers,
                                 num_residual_hiddens)
    x = jax.random.normal(kx, (B, embedding_dim, L), jnp.float32)

    ref = decoder_reference(params, x)
    fwd = jax.jit(decoder_forward)

    # f32 compute path: structural / exactness check against the lax reference.
    prep_f32 = prepare_decoder_params(params, compute_dtype=jnp.float32)
    out_f32 = jax.block_until_ready(fwd(prep_f32, x))
    assert out_f32.shape == (B, 1, L * (2 ** num_upsampling_layers)), out_f32.shape
    np.testing.assert_allclose(np.asarray(out_f32), np.asarray(ref), rtol=2e-4, atol=2e-4)

    # bf16 MXU-operand path (production path): loose tolerance for bf16 operand rounding.
    prep_bf16 = prepare_decoder_params(params, compute_dtype=jnp.bfloat16)
    out = jax.block_until_ready(fwd(prep_bf16, x))
    assert out.shape == (B, 1, L * (2 ** num_upsampling_layers)), out.shape
    np.testing.assert_allclose(np.asarray(out), np.asarray(ref), rtol=1e-1, atol=5e-2)

    print("KERNEL_OK")
</pallas_src>

<mosaic_0001>
module attributes {stable_mosaic.version = 11 : i64} {
  func.func @_decoder_kernel(%arg0: i32, %arg1: memref<8x16xf32, #tpu.memory_space<vmem>>, %arg2: memref<32x24xf32, #tpu.memory_space<vmem>>, %arg3: memref<32x1xf32, #tpu.memory_space<vmem>>, %arg4: memref<16x96xf32, #tpu.memory_space<vmem>>, %arg5: memref<16x1xf32, #tpu.memory_space<vmem>>, %arg6: memref<32x16xf32, #tpu.memory_space<vmem>>, %arg7: memref<32x1xf32, #tpu.memory_space<vmem>>, %arg8: memref<16x96xf32, #tpu.memory_space<vmem>>, %arg9: memref<16x1xf32, #tpu.memory_space<vmem>>, %arg10: memref<32x16xf32, #tpu.memory_space<vmem>>, %arg11: memref<32x1xf32, #tpu.memory_space<vmem>>, %arg12: memref<32x64xf32, #tpu.memory_space<vmem>>, %arg13: memref<32x64xf32, #tpu.memory_space<vmem>>, %arg14: memref<32x1xf32, #tpu.memory_space<vmem>>, %arg15: memref<16x64xf32, #tpu.memory_space<vmem>>, %arg16: memref<16x64xf32, #tpu.memory_space<vmem>>, %arg17: memref<16x1xf32, #tpu.memory_space<vmem>>, %arg18: memref<1x32xf32, #tpu.memory_space<vmem>>, %arg19: memref<1x32xf32, #tpu.memory_space<vmem>>, %arg20: memref<1x1xf32, #tpu.memory_space<vmem>>, %arg21: memref<1x1x128xf32, #tpu.memory_space<vmem>>) attributes {dimension_semantics = [#tpu.dimension_semantics<parallel>], iteration_bounds = array<i64: 1>, scalar_prefetch = 0 : i64, scratch_operands = 0 : i64, tpu.core_type = #tpu.core_type<tc>, window_params = [{transform_indices = @transform_0, window_bounds = array<i64: 8, 16>}, {pipeline_mode = #tpu.pipeline_mode<synchronous>, transform_indices = @transform_1, window_bounds = array<i64: 32, 24>}, {pipeline_mode = #tpu.pipeline_mode<synchronous>, transform_indices = @transform_2, window_bounds = array<i64: 32, 1>}, {pipeline_mode = #tpu.pipeline_mode<synchronous>, transform_indices = @transform_3, window_bounds = array<i64: 16, 96>}, {pipeline_mode = #tpu.pipeline_mode<synchronous>, transform_indices = @transform_4, window_bounds = array<i64: 16, 1>}, {pipeline_mode = #tpu.pipeline_mode<synchronous>, transform_indices = @transform_5, window_bounds = array<i64: 32, 16>}, {pipeline_mode = #tpu.pipeline_mode<synchronous>, transform_indices = @transform_6, window_bounds = array<i64: 32, 1>}, {pipeline_mode = #tpu.pipeline_mode<synchronous>, transform_indices = @transform_7, window_bounds = array<i64: 16, 96>}, {pipeline_mode = #tpu.pipeline_mode<synchronous>, transform_indices = @transform_8, window_bounds = array<i64: 16, 1>}, {pipeline_mode = #tpu.pipeline_mode<synchronous>, transform_indices = @transform_9, window_bounds = array<i64: 32, 16>}, {pipeline_mode = #tpu.pipeline_mode<synchronous>, transform_indices = @transform_10, window_bounds = array<i64: 32, 1>}, {pipeline_mode = #tpu.pipeline_mode<synchronous>, transform_indices = @transform_11, window_bounds = array<i64: 32, 64>}, {pipeline_mode = #tpu.pipeline_mode<synchronous>, transform_indices = @transform_12, window_bounds = array<i64: 32, 64>}, {pipeline_mode = #tpu.pipeline_mode<synchronous>, transform_indices = @transform_13, window_bounds = array<i64: 32, 1>}, {pipeline_mode = #tpu.pipeline_mode<synchronous>, transform_indices = @transform_14, window_bounds = array<i64: 16, 64>}, {pipeline_mode = #tpu.pipeline_mode<synchronous>, transform_indices = @transform_15, window_bounds = array<i64: 16, 64>}, {pipeline_mode = #tpu.pipeline_mode<synchronous>, transform_indices = @transform_16, window_bounds = array<i64: 16, 1>}, {pipeline_mode = #tpu.pipeline_mode<synchronous>, transform_indices = @transform_17, window_bounds = array<i64: 1, 32>}, {pipeline_mode = #tpu.pipeline_mode<synchronous>, transform_indices = @transform_18, window_bounds = array<i64: 1, 32>}, {pipeline_mode = #tpu.pipeline_mode<synchronous>, transform_indices = @transform_19, window_bounds = array<i64: 1, 1>}, {transform_indices = @transform_20, window_bounds = array<i64: 1, 1, 128>}]} {
    %0 = tpu.iota {dimensions = array<i32: 1>} : vector<1x16xi32>
    %c8_i32 = arith.constant 8 : i32
    %c0_i32 = arith.constant 0 : i32
    %1 = arith.cmpi eq, %c8_i32, %c0_i32 : i32
    %c1_i32 = arith.constant 1 : i32
    %2 = arith.select %1, %c1_i32, %c8_i32 : i32
    %3 = vector.broadcast %2 : i32 to vector<1x16xi32>
    %4 = arith.remsi %0, %3 : vector<1x16xi32>
    %c0_i32_0 = arith.constant 0 : i32
    %5 = vector.broadcast %c0_i32_0 : i32 to vector<1x16xi32>
    %6 = arith.cmpi ne, %4, %5 : vector<1x16xi32>
    %c0_i32_1 = arith.constant 0 : i32
    %7 = vector.broadcast %c0_i32_1 : i32 to vector<1x16xi32>
    %8 = arith.cmpi slt, %4, %7 : vector<1x16xi32>
    %c0_i32_2 = arith.constant 0 : i32
    %9 = arith.cmpi slt, %2, %c0_i32_2 : i32
    %10 = vector.broadcast %9 : i1 to vector<1x16xi1>
    %11 = vector.broadcast %10 : vector<1x16xi1> to vector<1x16xi1>
    %12 = arith.xori %8, %11 : vector<1x16xi1>
    %13 = arith.andi %12, %6 : vector<1x16xi1>
    %14 = vector.broadcast %2 : i32 to vector<1x16xi32>
    %15 = arith.addi %4, %14 : vector<1x16xi32>
    %16 = arith.select %13, %15, %4 : vector<1x16xi1>, vector<1x16xi32>
    %c0_i32_3 = arith.constant 0 : i32
    %17 = vector.broadcast %c0_i32_3 : i32 to vector<1x16xi32>
    %18 = arith.cmpi ne, %16, %17 : vector<1x16xi32>
    %c8_i32_4 = arith.constant 8 : i32
    %c0_i32_5 = arith.constant 0 : i32
    %19 = arith.cmpi eq, %c8_i32_4, %c0_i32_5 : i32
    %c1_i32_6 = arith.constant 1 : i32
    %20 = arith.select %19, %c1_i32_6, %c8_i32_4 : i32
    %21 = vector.broadcast %20 : i32 to vector<1x16xi32>
    %22 = arith.remsi %0, %21 : vector<1x16xi32>
    %c0_i32_7 = arith.constant 0 : i32
    %23 = vector.broadcast %c0_i32_7 : i32 to vector<1x16xi32>
    %24 = arith.cmpi ne, %22, %23 : vector<1x16xi32>
    %c0_i32_8 = arith.constant 0 : i32
    %25 = vector.broadcast %c0_i32_8 : i32 to vector<1x16xi32>
    %26 = arith.cmpi slt, %22, %25 : vector<1x16xi32>
    %c0_i32_9 = arith.constant 0 : i32
    %27 = arith.cmpi slt, %20, %c0_i32_9 : i32
    %28 = vector.broadcast %27 : i1 to vector<1x16xi1>
    %29 = vector.broadcast %28 : vector<1x16xi1> to vector<1x16xi1>
    %30 = arith.xori %26, %29 : vector<1x16xi1>
    %31 = arith.andi %30, %24 : vector<1x16xi1>
    %32 = vector.broadcast %20 : i32 to vector<1x16xi32>
    %33 = arith.addi %22, %32 : vector<1x16xi32>
    %34 = arith.select %31, %33, %22 : vector<1x16xi1>, vector<1x16xi32>
    %c7_i32 = arith.constant 7 : i32
    %35 = vector.broadcast %c7_i32 : i32 to vector<1x16xi32>
    %36 = arith.cmpi ne, %34, %35 : vector<1x16xi32>
    %c0 = arith.constant 0 : index
    %c0_10 = arith.constant 0 : index
    %37 = vector.load %arg1[%c0, %c0_10] : memref<8x16xf32, #tpu.memory_space<vmem>>, vector<8x16xf32>
    %cst = arith.constant 0.000000e+00 : f32
    %38 = vector.broadcast %cst : f32 to vector<8x1xf32>
    %39 = vector.extract_strided_slice %37 {offsets = [0, 0], sizes = [8, 15], strides = [1, 1]} : vector<8x16xf32> to vector<8x15xf32>
    %40 = tpu.concatenate %38, %39 in 1 : vector<8x1xf32>, vector<8x15xf32> -> vector<8x16xf32>
    %cst_11 = arith.constant 0.000000e+00 : f32
    %41 = vector.shape_cast %18 : vector<1x16xi1> to vector<1x16xi1>
    %42 = vector.broadcast %41 : vector<1x16xi1> to vector<8x16xi1>
    %43 = vector.broadcast %cst_11 : f32 to vector<8x16xf32>
    %44 = arith.select %42, %40, %43 : vector<8x16xi1>, vector<8x16xf32>
    %cst_12 = arith.constant 0.000000e+00 : f32
    %45 = vector.broadcast %cst_12 : f32 to vector<8x1xf32>
    %46 = vector.extract_strided_slice %37 {offsets = [0, 1], sizes = [8, 15], strides = [1, 1]} : vector<8x16xf32> to vector<8x15xf32>
    %47 = tpu.concatenate %46, %45 in 1 : vector<8x15xf32>, vector<8x1xf32> -> vector<8x16xf32>
    %cst_13 = arith.constant 0.000000e+00 : f32
    %48 = vector.shape_cast %36 : vector<1x16xi1> to vector<1x16xi1>
    %49 = vector.broadcast %48 : vector<1x16xi1> to vector<8x16xi1>
    %50 = vector.broadcast %cst_13 : f32 to vector<8x16xf32>
    %51 = arith.select %49, %47, %50 : vector<8x16xi1>, vector<8x16xf32>
    %52 = tpu.concatenate %44, %37, %51 in 0 : vector<8x16xf32>, vector<8x16xf32>, vector<8x16xf32> -> vector<24x16xf32>
    %c0_14 = arith.constant 0 : index
    %c0_15 = arith.constant 0 : index
    %53 = vector.load %arg2[%c0_14, %c0_15] : memref<32x24xf32, #tpu.memory_space<vmem>>, vector<32x24xf32>
    %cst_16 = arith.constant dense<0.000000e+00> : vector<32x16xf32>
    %54 = tpu.matmul %53, %52, %cst_16 {dimension_numbers = #tpu.dot_dimension_numbers<[1], [0], [0], [1], [0, 0, 1, 1], [], []>} : vector<32x24xf32>, vector<24x16xf32>, vector<32x16xf32> -> vector<32x16xf32>
    %c0_17 = arith.constant 0 : index
    %c0_18 = arith.constant 0 : index
    %55 = vector.load %arg3[%c0_17, %c0_18] : memref<32x1xf32, #tpu.memory_space<vmem>>, vector<32x1xf32>
    %56 = vector.broadcast %55 : vector<32x1xf32> to vector<32x16xf32>
    %57 = arith.addf %54, %56 : vector<32x16xf32>
    %cst_19 = arith.constant 0.000000e+00 : f32
    %58 = vector.broadcast %cst_19 : f32 to vector<32x16xf32>
    %59 = arith.maximumf %57, %58 : vector<32x16xf32>
    %cst_20 = arith.constant 0.000000e+00 : f32
    %60 = vector.broadcast %cst_20 : f32 to vector<32x1xf32>
    %61 = vector.extract_strided_slice %59 {offsets = [0, 0], sizes = [32, 15], strides = [1, 1]} : vector<32x16xf32> to vector<32x15xf32>
    %62 = tpu.concatenate %60, %61 in 1 : vector<32x1xf32>, vector<32x15xf32> -> vector<32x16xf32>
    %cst_21 = arith.constant 0.000000e+00 : f32
    %63 = vector.shape_cast %18 : vector<1x16xi1> to vector<1x16xi1>
    %64 = vector.broadcast %63 : vector<1x16xi1> to vector<32x16xi1>
    %65 = vector.broadcast %cst_21 : f32 to vector<32x16xf32>
    %66 = arith.select %64, %62, %65 : vector<32x16xi1>, vector<32x16xf32>
    %cst_22 = arith.constant 0.000000e+00 : f32
    %67 = vector.broadcast %cst_22 : f32 to vector<32x1xf32>
    %68 = vector.extract_strided_slice %59 {offsets = [0, 1], sizes = [32, 15], strides = [1, 1]} : vector<32x16xf32> to vector<32x15xf32>
    %69 = tpu.concatenate %68, %67 in 1 : vector<32x15xf32>, vector<32x1xf32> -> vector<32x16xf32>
    %cst_23 = arith.constant 0.000000e+00 : f32
    %70 = vector.shape_cast %36 : vector<1x16xi1> to vector<1x16xi1>
    %71 = vector.broadcast %70 : vector<1x16xi1> to vector<32x16xi1>
    %72 = vector.broadcast %cst_23 : f32 to vector<32x16xf32>
    %73 = arith.select %71, %69, %72 : vector<32x16xi1>, vector<32x16xf32>
    %74 = tpu.concatenate %66, %59, %73 in 0 : vector<32x16xf32>, vector<32x16xf32>, vector<32x16xf32> -> vector<96x16xf32>
    %c0_24 = arith.constant 0 : index
    %c0_25 = arith.constant 0 : index
    %75 = vector.load %arg4[%c0_24, %c0_25] : memref<16x96xf32, #tpu.memory_space<vmem>>, vector<16x96xf32>
    %cst_26 = arith.constant dense<0.000000e+00> : vector<16x16xf32>
    %76 = tpu.matmul %75, %74, %cst_26 {dimension_numbers = #tpu.dot_dimension_numbers<[1], [0], [0], [1], [0, 0, 1, 1], [], []>} : vector<16x96xf32>, vector<96x16xf32>, vector<16x16xf32> -> vector<16x16xf32>
    %c0_27 = arith.constant 0 : index
    %c0_28 = arith.constant 0 : index
    %77 = vector.load %arg5[%c0_27, %c0_28] : memref<16x1xf32, #tpu.memory_space<vmem>>, vector<16x1xf32>
    %78 = vector.broadcast %77 : vector<16x1xf32> to vector<16x16xf32>
    %79 = arith.addf %76, %78 : vector<16x16xf32>
    %cst_29 = arith.constant 0.000000e+00 : f32
    %80 = vector.broadcast %cst_29 : f32 to vector<16x16xf32>
    %81 = arith.maximumf %79, %80 : vector<16x16xf32>
    %c0_30 = arith.constant 0 : index
    %c0_31 = arith.constant 0 : index
    %82 = vector.load %arg6[%c0_30, %c0_31] : memref<32x16xf32, #tpu.memory_space<vmem>>, vector<32x16xf32>
    %cst_32 = arith.constant dense<0.000000e+00> : vector<32x16xf32>
    %83 = tpu.matmul %82, %81, %cst_32 {dimension_numbers = #tpu.dot_dimension_numbers<[1], [0], [0], [1], [0, 0, 1, 1], [], []>} : vector<32x16xf32>, vector<16x16xf32>, vector<32x16xf32> -> vector<32x16xf32>
    %84 = arith.addf %57, %83 : vector<32x16xf32>
    %c0_33 = arith.constant 0 : index
    %c0_34 = arith.constant 0 : index
    %85 = vector.load %arg7[%c0_33, %c0_34] : memref<32x1xf32, #tpu.memory_space<vmem>>, vector<32x1xf32>
    %86 = vector.broadcast %85 : vector<32x1xf32> to vector<32x16xf32>
    %87 = arith.addf %84, %86 : vector<32x16xf32>
    %cst_35 = arith.constant 0.000000e+00 : f32
    %88 = vector.broadcast %cst_35 : f32 to vector<32x16xf32>
    %89 = arith.maximumf %87, %88 : vector<32x16xf32>
    %cst_36 = arith.constant 0.000000e+00 : f32
    %90 = vector.broadcast %cst_36 : f32 to vector<32x1xf32>
    %91 = vector.extract_strided_slice %89 {offsets = [0, 0], sizes = [32, 15], strides = [1, 1]} : vector<32x16xf32> to vector<32x15xf32>
    %92 = tpu.concatenate %90, %91 in 1 : vector<32x1xf32>, vector<32x15xf32> -> vector<32x16xf32>
    %cst_37 = arith.constant 0.000000e+00 : f32
    %93 = vector.shape_cast %18 : vector<1x16xi1> to vector<1x16xi1>
    %94 = vector.broadcast %93 : vector<1x16xi1> to vector<32x16xi1>
    %95 = vector.broadcast %cst_37 : f32 to vector<32x16xf32>
    %96 = arith.select %94, %92, %95 : vector<32x16xi1>, vector<32x16xf32>
    %cst_38 = arith.constant 0.000000e+00 : f32
    %97 = vector.broadcast %cst_38 : f32 to vector<32x1xf32>
    %98 = vector.extract_strided_slice %89 {offsets = [0, 1], sizes = [32, 15], strides = [1, 1]} : vector<32x16xf32> to vector<32x15xf32>
    %99 = tpu.concatenate %98, %97 in 1 : vector<32x15xf32>, vector<32x1xf32> -> vector<32x16xf32>
    %cst_39 = arith.constant 0.000000e+00 : f32
    %100 = vector.shape_cast %36 : vector<1x16xi1> to vector<1x16xi1>
    %101 = vector.broadcast %100 : vector<1x16xi1> to vector<32x16xi1>
    %102 = vector.broadcast %cst_39 : f32 to vector<32x16xf32>
    %103 = arith.select %101, %99, %102 : vector<32x16xi1>, vector<32x16xf32>
    %104 = tpu.concatenate %96, %89, %103 in 0 : vector<32x16xf32>, vector<32x16xf32>, vector<32x16xf32> -> vector<96x16xf32>
    %c0_40 = arith.constant 0 : index
    %c0_41 = arith.constant 0 : index
    %105 = vector.load %arg8[%c0_40, %c0_41] : memref<16x96xf32, #tpu.memory_space<vmem>>, vector<16x96xf32>
    %cst_42 = arith.constant dense<0.000000e+00> : vector<16x16xf32>
    %106 = tpu.matmul %105, %104, %cst_42 {dimension_numbers = #tpu.dot_dimension_numbers<[1], [0], [0], [1], [0, 0, 1, 1], [], []>} : vector<16x96xf32>, vector<96x16xf32>, vector<16x16xf32> -> vector<16x16xf32>
    %c0_43 = arith.constant 0 : index
    %c0_44 = arith.constant 0 : index
    %107 = vector.load %arg9[%c0_43, %c0_44] : memref<16x1xf32, #tpu.memory_space<vmem>>, vector<16x1xf32>
    %108 = vector.broadcast %107 : vector<16x1xf32> to vector<16x16xf32>
    %109 = arith.addf %106, %108 : vector<16x16xf32>
    %cst_45 = arith.constant 0.000000e+00 : f32
    %110 = vector.broadcast %cst_45 : f32 to vector<16x16xf32>
    %111 = arith.maximumf %109, %110 : vector<16x16xf32>
    %c0_46 = arith.constant 0 : index
    %c0_47 = arith.constant 0 : index
    %112 = vector.load %arg10[%c0_46, %c0_47] : memref<32x16xf32, #tpu.memory_space<vmem>>, vector<32x16xf32>
    %cst_48 = arith.constant dense<0.000000e+00> : vector<32x16xf32>
    %113 = tpu.matmul %112, %111, %cst_48 {dimension_numbers = #tpu.dot_dimension_numbers<[1], [0], [0], [1], [0, 0, 1, 1], [], []>} : vector<32x16xf32>, vector<16x16xf32>, vector<32x16xf32> -> vector<32x16xf32>
    %114 = arith.addf %87, %113 : vector<32x16xf32>
    %c0_49 = arith.constant 0 : index
    %c0_50 = arith.constant 0 : index
    %115 = vector.load %arg11[%c0_49, %c0_50] : memref<32x1xf32, #tpu.memory_space<vmem>>, vector<32x1xf32>
    %116 = vector.broadcast %115 : vector<32x1xf32> to vector<32x16xf32>
    %117 = arith.addf %114, %116 : vector<32x16xf32>
    %cst_51 = arith.constant 0.000000e+00 : f32
    %118 = vector.broadcast %cst_51 : f32 to vector<32x16xf32>
    %119 = arith.maximumf %117, %118 : vector<32x16xf32>
    %cst_52 = arith.constant 0.000000e+00 : f32
    %120 = vector.broadcast %cst_52 : f32 to vector<32x1xf32>
    %121 = vector.extract_strided_slice %119 {offsets = [0, 0], sizes = [32, 15], strides = [1, 1]} : vector<32x16xf32> to vector<32x15xf32>
    %122 = tpu.concatenate %120, %121 in 1 : vector<32x1xf32>, vector<32x15xf32> -> vector<32x16xf32>
    %cst_53 = arith.constant 0.000000e+00 : f32
    %123 = vector.shape_cast %18 : vector<1x16xi1> to vector<1x16xi1>
    %124 = vector.broadcast %123 : vector<1x16xi1> to vector<32x16xi1>
    %125 = vector.broadcast %cst_53 : f32 to vector<32x16xf32>
    %126 = arith.select %124, %122, %125 : vector<32x16xi1>, vector<32x16xf32>
    %cst_54 = arith.constant 0.000000e+00 : f32
    %127 = vector.broadcast %cst_54 : f32 to vector<32x1xf32>
    %128 = vector.extract_strided_slice %119 {offsets = [0, 1], sizes = [32, 15], strides = [1, 1]} : vector<32x16xf32> to vector<32x15xf32>
    %129 = tpu.concatenate %128, %127 in 1 : vector<32x15xf32>, vector<32x1xf32> -> vector<32x16xf32>
    %cst_55 = arith.constant 0.000000e+00 : f32
    %130 = vector.shape_cast %36 : vector<1x16xi1> to vector<1x16xi1>
    %131 = vector.broadcast %130 : vector<1x16xi1> to vector<32x16xi1>
    %132 = vector.broadcast %cst_55 : f32 to vector<32x16xf32>
    %133 = arith.select %131, %129, %132 : vector<32x16xi1>, vector<32x16xf32>
    %134 = tpu.concatenate %119, %126 in 0 : vector<32x16xf32>, vector<32x16xf32> -> vector<64x16xf32>
    %c0_56 = arith.constant 0 : index
    %c0_57 = arith.constant 0 : index
    %135 = vector.load %arg12[%c0_56, %c0_57] : memref<32x64xf32, #tpu.memory_space<vmem>>, vector<32x64xf32>
    %cst_58 = arith.constant dense<0.000000e+00> : vector<32x16xf32>
    %136 = tpu.matmul %135, %134, %cst_58 {dimension_numbers = #tpu.dot_dimension_numbers<[1], [0], [0], [1], [0, 0, 1, 1], [], []>} : vector<32x64xf32>, vector<64x16xf32>, vector<32x16xf32> -> vector<32x16xf32>
    %c0_59 = arith.constant 0 : index
    %c0_60 = arith.constant 0 : index
    %137 = vector.load %arg14[%c0_59, %c0_60] : memref<32x1xf32, #tpu.memory_space<vmem>>, vector<32x1xf32>
    %138 = vector.broadcast %137 : vector<32x1xf32> to vector<32x16xf32>
    %139 = arith.addf %136, %138 : vector<32x16xf32>
    %140 = tpu.concatenate %119, %133 in 0 : vector<32x16xf32>, vector<32x16xf32> -> vector<64x16xf32>
    %c0_61 = arith.constant 0 : index
    %c0_62 = arith.constant 0 : index
    %141 = vector.load %arg13[%c0_61, %c0_62] : memref<32x64xf32, #tpu.memory_space<vmem>>, vector<32x64xf32>
    %cst_63 = arith.constant dense<0.000000e+00> : vector<32x16xf32>
    %142 = tpu.matmul %141, %140, %cst_63 {dimension_numbers = #tpu.dot_dimension_numbers<[1], [0], [0], [1], [0, 0, 1, 1], [], []>} : vector<32x64xf32>, vector<64x16xf32>, vector<32x16xf32> -> vector<32x16xf32>
    %c0_64 = arith.constant 0 : index
    %c0_65 = arith.constant 0 : index
    %143 = vector.load %arg14[%c0_64, %c0_65] : memref<32x1xf32, #tpu.memory_space<vmem>>, vector<32x1xf32>
    %144 = vector.broadcast %143 : vector<32x1xf32> to vector<32x16xf32>
    %145 = arith.addf %142, %144 : vector<32x16xf32>
    %cst_66 = arith.constant 0.000000e+00 : f32
    %146 = vector.broadcast %cst_66 : f32 to vector<32x16xf32>
    %147 = arith.maximumf %139, %146 : vector<32x16xf32>
    %cst_67 = arith.constant 0.000000e+00 : f32
    %148 = vector.broadcast %cst_67 : f32 to vector<32x16xf32>
    %149 = arith.maximumf %145, %148 : vector<32x16xf32>
    %cst_68 = arith.constant 0.000000e+00 : f32
    %150 = vector.broadcast %cst_68 : f32 to vector<32x1xf32>
    %151 = vector.extract_strided_slice %149 {offsets = [0, 0], sizes = [32, 15], strides = [1, 1]} : vector<32x16xf32> to vector<32x15xf32>
    %152 = tpu.concatenate %150, %151 in 1 : vector<32x1xf32>, vector<32x15xf32> -> vector<32x16xf32>
    %cst_69 = arith.constant 0.000000e+00 : f32
    %153 = vector.shape_cast %18 : vector<1x16xi1> to vector<1x16xi1>
    %154 = vector.broadcast %153 : vector<1x16xi1> to vector<32x16xi1>
    %155 = vector.broadcast %cst_69 : f32 to vector<32x16xf32>
    %156 = arith.select %154, %152, %155 : vector<32x16xi1>, vector<32x16xf32>
    %157 = tpu.concatenate %147, %156 in 0 : vector<32x16xf32>, vector<32x16xf32> -> vector<64x16xf32>
    %c0_70 = arith.constant 0 : index
    %c0_71 = arith.constant 0 : index
    %158 = vector.load %arg15[%c0_70, %c0_71] : memref<16x64xf32, #tpu.memory_space<vmem>>, vector<16x64xf32>
    %cst_72 = arith.constant dense<0.000000e+00> : vector<16x16xf32>
    %159 = tpu.matmul %158, %157, %cst_72 {dimension_numbers = #tpu.dot_dimension_numbers<[1], [0], [0], [1], [0, 0, 1, 1], [], []>} : vector<16x64xf32>, vector<64x16xf32>, vector<16x16xf32> -> vector<16x16xf32>
    %c0_73 = arith.constant 0 : index
    %c0_74 = arith.constant 0 : index
    %160 = vector.load %arg17[%c0_73, %c0_74] : memref<16x1xf32, #tpu.memory_space<vmem>>, vector<16x1xf32>
    %161 = vector.broadcast %160 : vector<16x1xf32> to vector<16x16xf32>
    %162 = arith.addf %159, %161 : vector<16x16xf32>
    %163 = tpu.concatenate %147, %149 in 0 : vector<32x16xf32>, vector<32x16xf32> -> vector<64x16xf32>
    %c0_75 = arith.constant 0 : index
    %c0_76 = arith.constant 0 : index
    %164 = vector.load %arg16[%c0_75, %c0_76] : memref<16x64xf32, #tpu.memory_space<vmem>>, vector<16x64xf32>
    %cst_77 = arith.constant dense<0.000000e+00> : vector<16x16xf32>
    %165 = tpu.matmul %164, %163, %cst_77 {dimension_numbers = #tpu.dot_dimension_numbers<[1], [0], [0], [1], [0, 0, 1, 1], [], []>} : vector<16x64xf32>, vector<64x16xf32>, vector<16x16xf32> -> vector<16x16xf32>
    %c0_78 = arith.constant 0 : index
    %c0_79 = arith.constant 0 : index
    %166 = vector.load %arg17[%c0_78, %c0_79] : memref<16x1xf32, #tpu.memory_space<vmem>>, vector<16x1xf32>
    %167 = vector.broadcast %166 : vector<16x1xf32> to vector<16x16xf32>
    %168 = arith.addf %165, %167 : vector<16x16xf32>
    %cst_80 = arith.constant 0.000000e+00 : f32
    %169 = vector.broadcast %cst_80 : f32 to vector<16x16xf32>
    %170 = arith.maximumf %162, %169 : vector<16x16xf32>
    %cst_81 = arith.constant 0.000000e+00 : f32
    %171 = vector.broadcast %cst_81 : f32 to vector<16x16xf32>
    %172 = arith.maximumf %168, %171 : vector<16x16xf32>
    %cst_82 = arith.constant 0.000000e+00 : f32
    %173 = vector.broadcast %cst_82 : f32 to vector<32x1xf32>
    %174 = vector.extract_strided_slice %147 {offsets = [0, 1], sizes = [32, 15], strides = [1, 1]} : vector<32x16xf32> to vector<32x15xf32>
    %175 = tpu.concatenate %174, %173 in 1 : vector<32x15xf32>, vector<32x1xf32> -> vector<32x16xf32>
    %cst_83 = arith.constant 0.000000e+00 : f32
    %176 = vector.shape_cast %36 : vector<1x16xi1> to vector<1x16xi1>
    %177 = vector.broadcast %176 : vector<1x16xi1> to vector<32x16xi1>
    %178 = vector.broadcast %cst_83 : f32 to vector<32x16xf32>
    %179 = arith.select %177, %175, %178 : vector<32x16xi1>, vector<32x16xf32>
    %180 = tpu.concatenate %149, %147 in 0 : vector<32x16xf32>, vector<32x16xf32> -> vector<64x16xf32>
    %c0_84 = arith.constant 0 : index
    %c0_85 = arith.constant 0 : index
    %181 = vector.load %arg15[%c0_84, %c0_85] : memref<16x64xf32, #tpu.memory_space<vmem>>, vector<16x64xf32>
    %cst_86 = arith.constant dense<0.000000e+00> : vector<16x16xf32>
    %182 = tpu.matmul %181, %180, %cst_86 {dimension_numbers = #tpu.dot_dimension_numbers<[1], [0], [0], [1], [0, 0, 1, 1], [], []>} : vector<16x64xf32>, vector<64x16xf32>, vector<16x16xf32> -> vector<16x16xf32>
    %c0_87 = arith.constant 0 : index
    %c0_88 = arith.constant 0 : index
    %183 = vector.load %arg17[%c0_87, %c0_88] : memref<16x1xf32, #tpu.memory_space<vmem>>, vector<16x1xf32>
    %184 = vector.broadcast %183 : vector<16x1xf32> to vector<16x16xf32>
    %185 = arith.addf %182, %184 : vector<16x16xf32>
    %186 = tpu.concatenate %149, %179 in 0 : vector<32x16xf32>, vector<32x16xf32> -> vector<64x16xf32>
    %c0_89 = arith.constant 0 : index
    %c0_90 = arith.constant 0 : index
    %187 = vector.load %arg16[%c0_89, %c0_90] : memref<16x64xf32, #tpu.memory_space<vmem>>, vector<16x64xf32>
    %cst_91 = arith.constant dense<0.000000e+00> : vector<16x16xf32>
    %188 = tpu.matmul %187, %186, %cst_91 {dimension_numbers = #tpu.dot_dimension_numbers<[1], [0], [0], [1], [0, 0, 1, 1], [], []>} : vector<16x64xf32>, vector<64x16xf32>, vector<16x16xf32> -> vector<16x16xf32>
    %c0_92 = arith.constant 0 : index
    %c0_93 = arith.constant 0 : index
    %189 = vector.load %arg17[%c0_92, %c0_93] : memref<16x1xf32, #tpu.memory_space<vmem>>, vector<16x1xf32>
    %190 = vector.broadcast %189 : vector<16x1xf32> to vector<16x16xf32>
    %191 = arith.addf %188, %190 : vector<16x16xf32>
    %cst_94 = arith.constant 0.000000e+00 : f32
    %192 = vector.broadcast %cst_94 : f32 to vector<16x16xf32>
    %193 = arith.maximumf %185, %192 : vector<16x16xf32>
    %cst_95 = arith.constant 0.000000e+00 : f32
    %194 = vector.broadcast %cst_95 : f32 to vector<16x16xf32>
    %195 = arith.maximumf %191, %194 : vector<16x16xf32>
    %cst_96 = arith.constant 0.000000e+00 : f32
    %196 = vector.broadcast %cst_96 : f32 to vector<16x1xf32>
    %197 = vector.extract_strided_slice %195 {offsets = [0, 0], sizes = [16, 15], strides = [1, 1]} : vector<16x16xf32> to vector<16x15xf32>
    %198 = tpu.concatenate %196, %197 in 1 : vector<16x1xf32>, vector<16x15xf32> -> vector<16x16xf32>
    %cst_97 = arith.constant 0.000000e+00 : f32
    %199 = vector.shape_cast %18 : vector<1x16xi1> to vector<1x16xi1>
    %200 = vector.broadcast %199 : vector<1x16xi1> to vector<16x16xi1>
    %201 = vector.broadcast %cst_97 : f32 to vector<16x16xf32>
    %202 = arith.select %200, %198, %201 : vector<16x16xi1>, vector<16x16xf32>
    %203 = tpu.concatenate %170, %202 in 0 : vector<16x16xf32>, vector<16x16xf32> -> vector<32x16xf32>
    %c0_98 = arith.constant 0 : index
    %c0_99 = arith.constant 0 : index
    %204 = vector.load %arg18[%c0_98, %c0_99] : memref<1x32xf32, #tpu.memory_space<vmem>>, vector<1x32xf32>
    %cst_100 = arith.constant dense<0.000000e+00> : vector<1x16xf32>
    %205 = tpu.matmul %204, %203, %cst_100 {dimension_numbers = #tpu.dot_dimension_numbers<[1], [0], [0], [1], [0, 0, 1, 1], [], []>} : vector<1x32xf32>, vector<32x16xf32>, vector<1x16xf32> -> vector<1x16xf32>
    %c0_101 = arith.constant 0 : index
    %c0_102 = arith.constant 0 : index
    %206 = vector.load %arg20[%c0_101, %c0_102] : memref<1x1xf32, #tpu.memory_space<vmem>>, vector<1x1xf32>
    %207 = vector.broadcast %206 : vector<1x1xf32> to vector<1x16xf32>
    %208 = arith.addf %205, %207 : vector<1x16xf32>
    %209 = tpu.concatenate %170, %172 in 0 : vector<16x16xf32>, vector<16x16xf32> -> vector<32x16xf32>
    %c0_103 = arith.constant 0 : index
    %c0_104 = arith.constant 0 : index
    %210 = vector.load %arg19[%c0_103, %c0_104] : memref<1x32xf32, #tpu.memory_space<vmem>>, vector<1x32xf32>
    %cst_105 = arith.constant dense<0.000000e+00> : vector<1x16xf32>
    %211 = tpu.matmul %210, %209, %cst_105 {dimension_numbers = #tpu.dot_dimension_numbers<[1], [0], [0], [1], [0, 0, 1, 1], [], []>} : vector<1x32xf32>, vector<32x16xf32>, vector<1x16xf32> -> vector<1x16xf32>
    %c0_106 = arith.constant 0 : index
    %c0_107 = arith.constant 0 : index
    %212 = vector.load %arg20[%c0_106, %c0_107] : memref<1x1xf32, #tpu.memory_space<vmem>>, vector<1x1xf32>
    %213 = vector.broadcast %212 : vector<1x1xf32> to vector<1x16xf32>
    %214 = arith.addf %211, %213 : vector<1x16xf32>
    %215 = tpu.concatenate %172, %170 in 0 : vector<16x16xf32>, vector<16x16xf32> -> vector<32x16xf32>
    %c0_108 = arith.constant 0 : index
    %c0_109 = arith.constant 0 : index
    %216 = vector.load %arg18[%c0_108, %c0_109] : memref<1x32xf32, #tpu.memory_space<vmem>>, vector<1x32xf32>
    %cst_110 = arith.constant dense<0.000000e+00> : vector<1x16xf32>
    %217 = tpu.matmul %216, %215, %cst_110 {dimension_numbers = #tpu.dot_dimension_numbers<[1], [0], [0], [1], [0, 0, 1, 1], [], []>} : vector<1x32xf32>, vector<32x16xf32>, vector<1x16xf32> -> vector<1x16xf32>
    %c0_111 = arith.constant 0 : index
    %c0_112 = arith.constant 0 : index
    %218 = vector.load %arg20[%c0_111, %c0_112] : memref<1x1xf32, #tpu.memory_space<vmem>>, vector<1x1xf32>
    %219 = vector.broadcast %218 : vector<1x1xf32> to vector<1x16xf32>
    %220 = arith.addf %217, %219 : vector<1x16xf32>
    %221 = tpu.concatenate %172, %193 in 0 : vector<16x16xf32>, vector<16x16xf32> -> vector<32x16xf32>
    %c0_113 = arith.constant 0 : index
    %c0_114 = arith.constant 0 : index
    %222 = vector.load %arg19[%c0_113, %c0_114] : memref<1x32xf32, #tpu.memory_space<vmem>>, vector<1x32xf32>
    %cst_115 = arith.constant dense<0.000000e+00> : vector<1x16xf32>
    %223 = tpu.matmul %222, %221, %cst_115 {dimension_numbers = #tpu.dot_dimension_numbers<[1], [0], [0], [1], [0, 0, 1, 1], [], []>} : vector<1x32xf32>, vector<32x16xf32>, vector<1x16xf32> -> vector<1x16xf32>
    %c0_116 = arith.constant 0 : index
    %c0_117 = arith.constant 0 : index
    %224 = vector.load %arg20[%c0_116, %c0_117] : memref<1x1xf32, #tpu.memory_space<vmem>>, vector<1x1xf32>
    %225 = vector.broadcast %224 : vector<1x1xf32> to vector<1x16xf32>
    %226 = arith.addf %223, %225 : vector<1x16xf32>
    %227 = tpu.concatenate %193, %172 in 0 : vector<16x16xf32>, vector<16x16xf32> -> vector<32x16xf32>
    %c0_118 = arith.constant 0 : index
    %c0_119 = arith.constant 0 : index
    %228 = vector.load %arg18[%c0_118, %c0_119] : memref<1x32xf32, #tpu.memory_space<vmem>>, vector<1x32xf32>
    %cst_120 = arith.constant dense<0.000000e+00> : vector<1x16xf32>
    %229 = tpu.matmul %228, %227, %cst_120 {dimension_numbers = #tpu.dot_dimension_numbers<[1], [0], [0], [1], [0, 0, 1, 1], [], []>} : vector<1x32xf32>, vector<32x16xf32>, vector<1x16xf32> -> vector<1x16xf32>
    %c0_121 = arith.constant 0 : index
    %c0_122 = arith.constant 0 : index
    %230 = vector.load %arg20[%c0_121, %c0_122] : memref<1x1xf32, #tpu.memory_space<vmem>>, vector<1x1xf32>
    %231 = vector.broadcast %230 : vector<1x1xf32> to vector<1x16xf32>
    %232 = arith.addf %229, %231 : vector<1x16xf32>
    %233 = tpu.concatenate %193, %195 in 0 : vector<16x16xf32>, vector<16x16xf32> -> vector<32x16xf32>
    %c0_123 = arith.constant 0 : index
    %c0_124 = arith.constant 0 : index
    %234 = vector.load %arg19[%c0_123, %c0_124] : memref<1x32xf32, #tpu.memory_space<vmem>>, vector<1x32xf32>
    %cst_125 = arith.constant dense<0.000000e+00> : vector<1x16xf32>
    %235 = tpu.matmul %234, %233, %cst_125 {dimension_numbers = #tpu.dot_dimension_numbers<[1], [0], [0], [1], [0, 0, 1, 1], [], []>} : vector<1x32xf32>, vector<32x16xf32>, vector<1x16xf32> -> vector<1x16xf32>
    %c0_126 = arith.constant 0 : index
    %c0_127 = arith.constant 0 : index
    %236 = vector.load %arg20[%c0_126, %c0_127] : memref<1x1xf32, #tpu.memory_space<vmem>>, vector<1x1xf32>
    %237 = vector.broadcast %236 : vector<1x1xf32> to vector<1x16xf32>
    %238 = arith.addf %235, %237 : vector<1x16xf32>
    %cst_128 = arith.constant 0.000000e+00 : f32
    %239 = vector.broadcast %cst_128 : f32 to vector<16x1xf32>
    %240 = vector.extract_strided_slice %170 {offsets = [0, 1], sizes = [16, 15], strides = [1, 1]} : vector<16x16xf32> to vector<16x15xf32>
    %241 = tpu.concatenate %240, %239 in 1 : vector<16x15xf32>, vector<16x1xf32> -> vector<16x16xf32>
    %cst_129 = arith.constant 0.000000e+00 : f32
    %242 = vector.shape_cast %36 : vector<1x16xi1> to vector<1x16xi1>
    %243 = vector.broadcast %242 : vector<1x16xi1> to vector<16x16xi1>
    %244 = vector.broadcast %cst_129 : f32 to vector<16x16xf32>
    %245 = arith.select %243, %241, %244 : vector<16x16xi1>, vector<16x16xf32>
    %246 = tpu.concatenate %195, %193 in 0 : vector<16x16xf32>, vector<16x16xf32> -> vector<32x16xf32>
    %c0_130 = arith.constant 0 : index
    %c0_131 = arith.constant 0 : index
    %247 = vector.load %arg18[%c0_130, %c0_131] : memref<1x32xf32, #tpu.memory_space<vmem>>, vector<1x32xf32>
    %cst_132 = arith.constant dense<0.000000e+00> : vector<1x16xf32>
    %248 = tpu.matmul %247, %246, %cst_132 {dimension_numbers = #tpu.dot_dimension_numbers<[1], [0], [0], [1], [0, 0, 1, 1], [], []>} : vector<1x32xf32>, vector<32x16xf32>, vector<1x16xf32> -> vector<1x16xf32>
    %c0_133 = arith.constant 0 : index
    %c0_134 = arith.constant 0 : index
    %249 = vector.load %arg20[%c0_133, %c0_134] : memref<1x1xf32, #tpu.memory_space<vmem>>, vector<1x1xf32>
    %250 = vector.broadcast %249 : vector<1x1xf32> to vector<1x16xf32>
    %251 = arith.addf %248, %250 : vector<1x16xf32>
    %252 = tpu.concatenate %195, %245 in 0 : vector<16x16xf32>, vector<16x16xf32> -> vector<32x16xf32>
    %c0_135 = arith.constant 0 : index
    %c0_136 = arith.constant 0 : index
    %253 = vector.load %arg19[%c0_135, %c0_136] : memref<1x32xf32, #tpu.memory_space<vmem>>, vector<1x32xf32>
    %cst_137 = arith.constant dense<0.000000e+00> : vector<1x16xf32>
    %254 = tpu.matmul %253, %252, %cst_137 {dimension_numbers = #tpu.dot_dimension_numbers<[1], [0], [0], [1], [0, 0, 1, 1], [], []>} : vector<1x32xf32>, vector<32x16xf32>, vector<1x16xf32> -> vector<1x16xf32>
    %c0_138 = arith.constant 0 : index
    %c0_139 = arith.constant 0 : index
    %255 = vector.load %arg20[%c0_138, %c0_139] : memref<1x1xf32, #tpu.memory_space<vmem>>, vector<1x1xf32>
    %256 = vector.broadcast %255 : vector<1x1xf32> to vector<1x16xf32>
    %257 = arith.addf %254, %256 : vector<1x16xf32>
    %258 = tpu.concatenate %208, %214, %220, %226, %232, %238, %251, %257 in 1 : vector<1x16xf32>, vector<1x16xf32>, vector<1x16xf32>, vector<1x16xf32>, vector<1x16xf32>, vector<1x16xf32>, vector<1x16xf32>, vector<1x16xf32> -> vector<1x128xf32>
    %c0_140 = arith.constant 0 : index
    %c0_141 = arith.constant 0 : index
    %c0_142 = arith.constant 0 : index
    %259 = vector.load %arg21[%c0_140, %c0_141, %c0_142] : memref<1x1x128xf32, #tpu.memory_space<vmem>>, vector<1x1x128xf32>
    %260 = vector.shape_cast %259 : vector<1x1x128xf32> to vector<1x128xf32>
    %261 = vector.shape_cast %258 : vector<1x128xf32> to vector<1x1x128xf32>
    tpu.vector_store %arg21[%c0_140, %c0_141, %c0_142], %261 {strides = array<i32>} : memref<1x1x128xf32, #tpu.memory_space<vmem>>, vector<1x1x128xf32>,
    return
  }
  func.func @transform_0(%arg0: i32) -> (i32, i32) {
    %c0_i32 = arith.constant 0 : i32
    %c0_i32_0 = arith.constant 0 : i32
    return %c0_i32, %arg0 : i32, i32
  }
  func.func @transform_1(%arg0: i32) -> (i32, i32) {
    %c0_i32 = arith.constant 0 : i32
    %c0_i32_0 = arith.constant 0 : i32
    %c0_i32_1 = arith.constant 0 : i32
    return %c0_i32, %c0_i32_0 : i32, i32
  }
  func.func @transform_2(%arg0: i32) -> (i32, i32) {
    %c0_i32 = arith.constant 0 : i32
    %c0_i32_0 = arith.constant 0 : i32
    %c0_i32_1 = arith.constant 0 : i32
    return %c0_i32, %c0_i32_0 : i32, i32
  }
  func.func @transform_3(%arg0: i32) -> (i32, i32) {
    %c0_i32 = arith.constant 0 : i32
    %c0_i32_0 = arith.constant 0 : i32
    %c0_i32_1 = arith.constant 0 : i32
    return %c0_i32, %c0_i32_0 : i32, i32
  }
  func.func @transform_4(%arg0: i32) -> (i32, i32) {
    %c0_i32 = arith.constant 0 : i32
    %c0_i32_0 = arith.constant 0 : i32
    %c0_i32_1 = arith.constant 0 : i32
    return %c0_i32, %c0_i32_0 : i32, i32
  }
  func.func @transform_5(%arg0: i32) -> (i32, i32) {
    %c0_i32 = arith.constant 0 : i32
    %c0_i32_0 = arith.constant 0 : i32
    %c0_i32_1 = arith.constant 0 : i32
    return %c0_i32, %c0_i32_0 : i32, i32
  }
  func.func @transform_6(%arg0: i32) -> (i32, i32) {
    %c0_i32 = arith.constant 0 : i32
    %c0_i32_0 = arith.constant 0 : i32
    %c0_i32_1 = arith.constant 0 : i32
    return %c0_i32, %c0_i32_0 : i32, i32
  }
  func.func @transform_7(%arg0: i32) -> (i32, i32) {
    %c0_i32 = arith.constant 0 : i32
    %c0_i32_0 = arith.constant 0 : i32
    %c0_i32_1 = arith.constant 0 : i32
    return %c0_i32, %c0_i32_0 : i32, i32
  }
  func.func @transform_8(%arg0: i32) -> (i32, i32) {
    %c0_i32 = arith.constant 0 : i32
    %c0_i32_0 = arith.constant 0 : i32
    %c0_i32_1 = arith.constant 0 : i32
    return %c0_i32, %c0_i32_0 : i32, i32
  }
  func.func @transform_9(%arg0: i32) -> (i32, i32) {
    %c0_i32 = arith.constant 0 : i32
    %c0_i32_0 = arith.constant 0 : i32
    %c0_i32_1 = arith.constant 0 : i32
    return %c0_i32, %c0_i32_0 : i32, i32
  }
  func.func @transform_10(%arg0: i32) -> (i32, i32) {
    %c0_i32 = arith.constant 0 : i32
    %c0_i32_0 = arith.constant 0 : i32
    %c0_i32_1 = arith.constant 0 : i32
    return %c0_i32, %c0_i32_0 : i32, i32
  }
  func.func @transform_11(%arg0: i32) -> (i32, i32) {
    %c0_i32 = arith.constant 0 : i32
    %c0_i32_0 = arith.constant 0 : i32
    %c0_i32_1 = arith.constant 0 : i32
    return %c0_i32, %c0_i32_0 : i32, i32
  }
  func.func @transform_12(%arg0: i32) -> (i32, i32) {
    %c0_i32 = arith.constant 0 : i32
    %c0_i32_0 = arith.constant 0 : i32
    %c0_i32_1 = arith.constant 0 : i32
    return %c0_i32, %c0_i32_0 : i32, i32
  }
  func.func @transform_13(%arg0: i32) -> (i32, i32) {
    %c0_i32 = arith.constant 0 : i32
    %c0_i32_0 = arith.constant 0 : i32
    %c0_i32_1 = arith.constant 0 : i32
    return %c0_i32, %c0_i32_0 : i32, i32
  }
  func.func @transform_14(%arg0: i32) -> (i32, i32) {
    %c0_i32 = arith.constant 0 : i32
    %c0_i32_0 = arith.constant 0 : i32
    %c0_i32_1 = arith.constant 0 : i32
    return %c0_i32, %c0_i32_0 : i32, i32
  }
  func.func @transform_15(%arg0: i32) -> (i32, i32) {
    %c0_i32 = arith.constant 0 : i32
    %c0_i32_0 = arith.constant 0 : i32
    %c0_i32_1 = arith.constant 0 : i32
    return %c0_i32, %c0_i32_0 : i32, i32
  }
  func.func @transform_16(%arg0: i32) -> (i32, i32) {
    %c0_i32 = arith.constant 0 : i32
    %c0_i32_0 = arith.constant 0 : i32
    %c0_i32_1 = arith.constant 0 : i32
    return %c0_i32, %c0_i32_0 : i32, i32
  }
  func.func @transform_17(%arg0: i32) -> (i32, i32) {
    %c0_i32 = arith.constant 0 : i32
    %c0_i32_0 = arith.constant 0 : i32
    %c0_i32_1 = arith.constant 0 : i32
    return %c0_i32, %c0_i32_0 : i32, i32
  }
  func.func @transform_18(%arg0: i32) -> (i32, i32) {
    %c0_i32 = arith.constant 0 : i32
    %c0_i32_0 = arith.constant 0 : i32
    %c0_i32_1 = arith.constant 0 : i32
    return %c0_i32, %c0_i32_0 : i32, i32
  }
  func.func @transform_19(%arg0: i32) -> (i32, i32) {
    %c0_i32 = arith.constant 0 : i32
    %c0_i32_0 = arith.constant 0 : i32
    %c0_i32_1 = arith.constant 0 : i32
    return %c0_i32, %c0_i32_0 : i32, i32
  }
  func.func @transform_20(%arg0: i32) -> (i32, i32, i32) {
    %c0_i32 = arith.constant 0 : i32
    %c0_i32_0 = arith.constant 0 : i32
    %c0_i32_1 = arith.constant 0 : i32
    return %arg0, %c0_i32, %c0_i32_0 : i32, i32, i32
  }
}

</mosaic_0001>

<llo_original>
// kernel: decoder_forward.1
$region0: #{decoder_forward.1}
  #allocation0 [shape = 'u32[]', space=smem, size = 0x4, offset = 0x4, fixed_abs, tag = 'smem constant byte address 0x4 - core index']
  #allocation1 [shape = 'u32[144,128]{1,0:T(1,128)}', space=vmem, size = 0x12000, scoped, tag = 'internal scratch']
  #allocation2 [shape = 'f32[1,1]{1,0:T(1,128)S(1)}', space=vmem, size = 0x200, scoped, tag = 'scoped memory for decoder_forward.1']
  %s0 = inlined_call_operand.vmem [shape: f32[8,16], index: 0, kind: input, shape index: {}]
  %s1 = inlined_call_operand.vmem [shape: f32[32,24], index: 1, kind: input, shape index: {}]
  %s2 = inlined_call_operand.vmem [shape: f32[32,1], index: 2, kind: input, shape index: {}]
  %s3 = inlined_call_operand.vmem [shape: f32[16,96], index: 3, kind: input, shape index: {}]
  %s4 = inlined_call_operand.vmem [shape: f32[16,1], index: 4, kind: input, shape index: {}]
  %s5 = inlined_call_operand.vmem [shape: f32[32,16], index: 5, kind: input, shape index: {}]
  %s6 = inlined_call_operand.vmem [shape: f32[32,1], index: 6, kind: input, shape index: {}]
  %s7 = inlined_call_operand.vmem [shape: f32[16,96], index: 7, kind: input, shape index: {}]
  %s8 = inlined_call_operand.vmem [shape: f32[16,1], index: 8, kind: input, shape index: {}]
  %s9 = inlined_call_operand.vmem [shape: f32[32,16], index: 9, kind: input, shape index: {}]
  %s10 = inlined_call_operand.vmem [shape: f32[32,1], index: 10, kind: input, shape index: {}]
  %s11 = inlined_call_operand.vmem [shape: f32[32,64], index: 11, kind: input, shape index: {}]
  %s12 = inlined_call_operand.vmem [shape: f32[32,64], index: 12, kind: input, shape index: {}]
  %s13 = inlined_call_operand.vmem [shape: f32[32,1], index: 13, kind: input, shape index: {}]
  %s14 = inlined_call_operand.vmem [shape: f32[16,64], index: 14, kind: input, shape index: {}]
  %s15 = inlined_call_operand.vmem [shape: f32[16,64], index: 15, kind: input, shape index: {}]
  %s16 = inlined_call_operand.vmem [shape: f32[16,1], index: 16, kind: input, shape index: {}]
  %s17 = inlined_call_operand.vmem [shape: f32[1,32], index: 17, kind: input, shape index: {}]
  %s18 = inlined_call_operand.vmem [shape: f32[1,32], index: 18, kind: input, shape index: {}]
  %s19 = inlined_call_operand.<no memory space> [shape: f32[1,1], index: 19, kind: input, shape index: {}]
  %s20 = inlined_call_operand.vmem [shape: f32[1,1,128], index: 20, kind: output, shape index: {}]
  %s21 = sld [smem:[#allocation0]]
  $region90: #{decoder_forward.1} parent=0
    _
  %s23 = ssub.s32 1, %s21
  %s24 = scalar_select 0, %s23, %s21
  %v25 = vstv %s19
  %26 = vst [vmem:[#allocation2] sm:$0x1] %v25
  // Predicated region
  $region2: #{decoder_forward.1} parent=0 // pred_check
    _
  $region3: #{decoder_forward.1} parent=0 // pred_check_branch
    %28 = sbr.rel (0) target = $region5
  $region4: #{decoder_forward.1} parent=0 // pred_region
    _
  $region5: #{decoder_forward.1} parent=0 // pred_fallthru
    _
  // Predicated region
  $region6: #{decoder_forward.1} parent=0 // pred_check
    _
  $region7: #{decoder_forward.1} parent=0 // pred_check_branch
    %30 = sbr.rel (0) target = $region9
  $region8: #{decoder_forward.1} parent=0 // pred_region
    _
  $region9: #{decoder_forward.1} parent=0 // pred_fallthru
    _
  // Predicated region
  $region10: #{decoder_forward.1} parent=0 // pred_check
    _
  $region11: #{decoder_forward.1} parent=0 // pred_check_branch
    %32 = sbr.rel (0) target = $region13
  $region12: #{decoder_forward.1} parent=0 // pred_region
    _
  $region13: #{decoder_forward.1} parent=0 // pred_fallthru
    _
  // Predicated region
  $region14: #{decoder_forward.1} parent=0 // pred_check
    _
  $region15: #{decoder_forward.1} parent=0 // pred_check_branch
    %34 = sbr.rel (0) target = $region17
  $region16: #{decoder_forward.1} parent=0 // pred_region
    _
  $region17: #{decoder_forward.1} parent=0 // pred_fallthru
    _
  // Predicated region
  $region18: #{decoder_forward.1} parent=0 // pred_check
    _
  $region19: #{decoder_forward.1} parent=0 // pred_check_branch
    %36 = sbr.rel (0) target = $region21
  $region20: #{decoder_forward.1} parent=0 // pred_region
    _
  $region21: #{decoder_forward.1} parent=0 // pred_fallthru
    _
  // Predicated region
  $region22: #{decoder_forward.1} parent=0 // pred_check
    _
  $region23: #{decoder_forward.1} parent=0 // pred_check_branch
    %38 = sbr.rel (0) target = $region25
  $region24: #{decoder_forward.1} parent=0 // pred_region
    _
  $region25: #{decoder_forward.1} parent=0 // pred_fallthru
    _
  // Predicated region
  $region26: #{decoder_forward.1} parent=0 // pred_check
    _
  $region27: #{decoder_forward.1} parent=0 // pred_check_branch
    %40 = sbr.rel (0) target = $region29
  $region28: #{decoder_forward.1} parent=0 // pred_region
    _
  $region29: #{decoder_forward.1} parent=0 // pred_fallthru
    _
  // Predicated region
  $region30: #{decoder_forward.1} parent=0 // pred_check
    _
  $region31: #{decoder_forward.1} parent=0 // pred_check_branch
    %42 = sbr.rel (0) target = $region33
  $region32: #{decoder_forward.1} parent=0 // pred_region
    _
  $region33: #{decoder_forward.1} parent=0 // pred_fallthru
    _
  // Predicated region
  $region34: #{decoder_forward.1} parent=0 // pred_check
    _
  $region35: #{decoder_forward.1} parent=0 // pred_check_branch
    %44 = sbr.rel (0) target = $region37
  $region36: #{decoder_forward.1} parent=0 // pred_region
    _
  $region37: #{decoder_forward.1} parent=0 // pred_fallthru
    _
  // Predicated region
  $region38: #{decoder_forward.1} parent=0 // pred_check
    _
  $region39: #{decoder_forward.1} parent=0 // pred_check_branch
    %46 = sbr.rel (0) target = $region41
  $region40: #{decoder_forward.1} parent=0 // pred_region
    _
  $region41: #{decoder_forward.1} parent=0 // pred_fallthru
    _
  // Predicated region
  $region42: #{decoder_forward.1} parent=0 // pred_check
    _
  $region43: #{decoder_forward.1} parent=0 // pred_check_branch
    %48 = sbr.rel (0) target = $region45
  $region44: #{decoder_forward.1} parent=0 // pred_region
    _
  $region45: #{decoder_forward.1} parent=0 // pred_fallthru
    _
  // Predicated region
  $region46: #{decoder_forward.1} parent=0 // pred_check
    _
  $region47: #{decoder_forward.1} parent=0 // pred_check_branch
    %50 = sbr.rel (0) target = $region49
  $region48: #{decoder_forward.1} parent=0 // pred_region
    _
  $region49: #{decoder_forward.1} parent=0 // pred_fallthru
    _
  // Predicated region
  $region50: #{decoder_forward.1} parent=0 // pred_check
    _
  $region51: #{decoder_forward.1} parent=0 // pred_check_branch
    %52 = sbr.rel (0) target = $region53
  $region52: #{decoder_forward.1} parent=0 // pred_region
    _
  $region53: #{decoder_forward.1} parent=0 // pred_fallthru
    _
  // Predicated region
  $region54: #{decoder_forward.1} parent=0 // pred_check
    _
  $region55: #{decoder_forward.1} parent=0 // pred_check_branch
    %54 = sbr.rel (0) target = $region57
  $region56: #{decoder_forward.1} parent=0 // pred_region
    _
  $region57: #{decoder_forward.1} parent=0 // pred_fallthru
    _
  // Predicated region
  $region58: #{decoder_forward.1} parent=0 // pred_check
    _
  $region59: #{decoder_forward.1} parent=0 // pred_check_branch
    %56 = sbr.rel (0) target = $region61
  $region60: #{decoder_forward.1} parent=0 // pred_region
    _
  $region61: #{decoder_forward.1} parent=0 // pred_fallthru
    _
  // Predicated region
  $region62: #{decoder_forward.1} parent=0 // pred_check
    _
  $region63: #{decoder_forward.1} parent=0 // pred_check_branch
    %58 = sbr.rel (0) target = $region65
  $region64: #{decoder_forward.1} parent=0 // pred_region
    _
  $region65: #{decoder_forward.1} parent=0 // pred_fallthru
    _
  // Predicated region
  $region66: #{decoder_forward.1} parent=0 // pred_check
    _
  $region67: #{decoder_forward.1} parent=0 // pred_check_branch
    %60 = sbr.rel (0) target = $region69
  $region68: #{decoder_forward.1} parent=0 // pred_region
    _
  $region69: #{decoder_forward.1} parent=0 // pred_fallthru
    _
  // Predicated region
  $region70: #{decoder_forward.1} parent=0 // pred_check
    _
  $region71: #{decoder_forward.1} parent=0 // pred_check_branch
    %62 = sbr.rel (0) target = $region73
  $region72: #{decoder_forward.1} parent=0 // pred_region
    _
  $region73: #{decoder_forward.1} parent=0 // pred_fallthru
    _
  // Predicated region
  $region74: #{decoder_forward.1} parent=0 // pred_check
    _
  $region75: #{decoder_forward.1} parent=0 // pred_check_branch
    %64 = sbr.rel (0) target = $region77
  $region76: #{decoder_forward.1} parent=0 // pred_region
    _
  $region77: #{decoder_forward.1} parent=0 // pred_fallthru
    _
  // Predicated region
  $region78: #{decoder_forward.1} parent=0 // pred_check
    _
  $region79: #{decoder_forward.1} parent=0 // pred_check_branch
    %66 = sbr.rel (0) target = $region81
  $region80: #{decoder_forward.1} parent=0 // pred_region
    _
  $region81: #{decoder_forward.1} parent=0 // pred_fallthru
    _
  %v67 = vlaneseq
  %v68 = vand.u32 %v67, 127
  %vm69 = vcmp.lt.s32.totalorder %v68, 0
  %v70 = vsub.s32 0, %v68
  %v71 = vsel %vm69, %v70, %v68
  %v72 = vshrl.u32 %v71, 3
  %v73 = vand.u32 %v71, 7
  %v74 = vsub.s32 0, %v73
  %v75 = vsel %vm69, %v74, %v73
  %vm76 = vcmp.ne.s32.totalorder %v75, 0
  %vm77 = vcmp.lt.s32.totalorder %v75, 0
  %vm78 = vmand %vm77, %vm76
  %v79 = vadd.s32 %v75, 8
  %v80 = vsel %vm78, %v79, %v75
  %vm81 = vcmp.ne.s32.totalorder %v80, 0
  %vm82 = vcmp.ne.s32.totalorder %v80, 7
  %v83 = vld [vmem:[%s0] sm:$0xff]
  %85 = vrot.lane.b32.xlu0 %v83, 1
  %v86 = vpop.permute.xlu0 %85
  %vm88 = vcmask 7168
  %v89 = vsel %vm88, 0.0, %v86
  %v90 = vsel %vm81, 1, 0
  %vm91 = vcmp.eq.s32.totalorder %v90, 1
  %v92 = vsel %vm91, %v89, 0.0
  %93 = vrot.lane.b32.xlu0 %v83, 127
  %v94 = vpop.permute.xlu0 %93
  %vm96 = vcmask 121856
  %v97 = vsel %vm96, %v94, 0.0
  %v98 = vsel %vm82, 1, 0
  %vm99 = vcmp.eq.s32.totalorder %v98, 1
  %v100 = vsel %vm99, %v97, 0.0
  %v101 = vld [vmem:[%s1] sm:$0xff]
  %v102 = vld [vmem:[%s1 + $0x8] sm:$0xff]
  %v103 = vld [vmem:[%s1 + $0x10] sm:$0xff]
  %v104 = vld [vmem:[%s1 + $0x18] sm:$0xff]
  %v105 = vld [vmem:[%s2] sm:$0xff]
  %v106 = vld [vmem:[%s2 + $0x8] sm:$0xff]
  %v107 = vld [vmem:[%s2 + $0x10] sm:$0xff]
  %v108 = vld [vmem:[%s2 + $0x18] sm:$0xff]
  %110 = vset.pattern.permute.xlu0 0
  %111 = vperm.xlu0 %110, %v105
  %v112 = vpop.permute.xlu0 %111
  %115 = vset.pattern.permute.xlu0 0
  %116 = vperm.xlu0 %115, %v106
  %v117 = vpop.permute.xlu0 %116
  %120 = vset.pattern.permute.xlu0 0
  %121 = vperm.xlu0 %120, %v107
  %v122 = vpop.permute.xlu0 %121
  %125 = vset.pattern.permute.xlu0 0
  %126 = vperm.xlu0 %125, %v108
  %v127 = vpop.permute.xlu0 %126
  %vm129 = vcmask 195584
  %v131 = vsel %vm129, %v101, 0
  %v134 = vsel %vm129, %v102, 0
  %v137 = vsel %vm129, %v103, 0
  %v140 = vsel %vm129, %v104, 0
  %142 = vmatprep.subr.mxu0 0.0
  %143 = vmatpush1.msra.mxu0 %v92
  %144 = vmatprep.subr.mxu0 0.0
  %145 = vmatpush1.msra.mxu0 %v83
  %146 = vmatprep.subr.mxu0 0.0
  %147 = vmatpush1.msra.mxu0 %v100
  %148 = vmatprep.subr.mxu0 0.0
  %149 = vmatpush1.msra.mxu0 0.0
  %150 = vmatprep.subr.mxu0 0.0
  %151 = vmatpush1.msra.mxu0 0.0
  %152 = vmatprep.subr.mxu0 0.0
  %153 = vmatpush1.msra.mxu0 0.0
  %154 = vmatprep.subr.mxu0 0.0
  %155 = vmatpush1.msra.mxu0 0.0
  %156 = vmatprep.subr.mxu0 0.0
  %157 = vmatpush1.msra.mxu0 0.0
  %158 = vmatprep.subr.mxu0 0.0
  %159 = vmatpush1.msra.mxu0 0.0
  %160 = vmatprep.subr.mxu0 0.0
  %161 = vmatpush1.msra.mxu0 0.0
  %162 = vmatprep.subr.mxu0 0.0
  %163 = vmatpush1.msra.mxu0 0.0
  %164 = vmatprep.subr.mxu0 0.0
  %165 = vmatpush1.msra.mxu0 0.0
  %166 = vmatprep.subr.mxu0 0.0
  %167 = vmatpush1.msra.mxu0 0.0
  %168 = vmatprep.subr.mxu0 0.0
  %169 = vmatpush1.msra.mxu0 0.0
  %170 = vmatprep.subr.mxu0 0.0
  %171 = vmatpush1.msra.mxu0 0.0
  %172 = vmatprep.subr.mxu0 0.0
  %173 = vmatpush1.msra.mxu0 0.0
  %174 = vmatprep.subr.mxu0 0.0
  %175 = vmatpush1.msra.mxu0 0.0
  %176 = vmatprep.subr.mxu0 0.0
  %177 = vmatpush1.msra.mxu0 0.0
  %178 = vmatprep.subr.mxu0 0.0
  %179 = vmatpush1.msra.mxu0 0.0
  %180 = vmatprep.subr.mxu0 0.0
  %181 = vmatpush1.msra.mxu0 0.0
  %182 = vmatprep.subr.mxu0 0.0
  %183 = vmatpush1.msra.mxu0 0.0
  %184 = vmatprep.subr.mxu0 0.0
  %185 = vmatpush1.msra.mxu0 0.0
  %186 = vmatprep.subr.mxu0 0.0
  %187 = vmatpush1.msra.mxu0 0.0
  %188 = vmatprep.subr.mxu0 0.0
  %189 = vmatpush1.msra.mxu0 0.0
  %190 = vmatprep.subr.mxu0 0.0
  %191 = vmatpush1.msra.mxu0 0.0
  %192 = vmatprep.subr.mxu0 0.0
  %193 = vmatpush1.msra.mxu0 0.0
  %194 = vmatprep.subr.mxu0 0.0
  %195 = vmatpush1.msra.mxu0 0.0
  %196 = vmatprep.subr.mxu0 0.0
  %197 = vmatpush1.msra.mxu0 0.0
  %198 = vmatprep.subr.mxu0 0.0
  %199 = vmatpush1.msra.mxu0 0.0
  %200 = vmatprep.subr.mxu0 0.0
  %201 = vmatpush1.msra.mxu0 0.0
  %202 = vmatprep.subr.mxu0 0.0
  %203 = vmatpush1.msra.mxu0 0.0
  %204 = vmatprep.subr.mxu0 0.0
  %205 = vmatpush1.msra.mxu0 0.0
  %206 = vmatprep.mubr.f32.mxu0 0.0
  %207 = vmatmul.mubr.f32.gmra.mrb[0].mxu0 %v131
  %v208 = vpop.f32.mrb[0].mxu0
  %v209 = vadd.f32 %v112, %v208
  %v210 = vpop.f32.mrb[0].mxu0
  %211 = vmatprep.mubr.f32.mxu0 0.0
  %212 = vmatmul.mubr.f32.gmra.mrb[0].mxu0 %v134
  %v213 = vpop.f32.mrb[0].mxu0
  %v214 = vadd.f32 %v117, %v213
  %v215 = vpop.f32.mrb[0].mxu0
  %216 = vmatprep.mubr.f32.mxu0 0.0
  %217 = vmatmul.mubr.f32.gmra.mrb[0].mxu0 %v137
  %v218 = vpop.f32.mrb[0].mxu0
  %v219 = vadd.f32 %v122, %v218
  %v220 = vpop.f32.mrb[0].mxu0
  %221 = vmatprep.mubr.f32.mxu0 0.0
  %222 = vmatmul.mubr.f32.gmra.mrb[0].mxu0 %v140
  %v223 = vpop.f32.mrb[0].mxu0
  %v224 = vadd.f32 %v127, %v223
  %v225 = vpop.f32.mrb[0].mxu0
  %226 = vdwg.mxu0
  %v227 = vmax.f32 %v209, 0.0
  %v228 = vmax.f32 %v214, 0.0
  %v229 = vmax.f32 %v219, 0.0
  %v230 = vmax.f32 %v224, 0.0
  %235 = vrot.lane.b32.xlu0 %v227, 1
  %v236 = vpop.permute.xlu0 %235
  %237 = vrot.lane.b32.xlu0 %v228, 1
  %v238 = vpop.permute.xlu0 %237
  %239 = vrot.lane.b32.xlu0 %v229, 1
  %v240 = vpop.permute.xlu0 %239
  %241 = vrot.lane.b32.xlu0 %v230, 1
  %v242 = vpop.permute.xlu0 %241
  %v247 = vsel %vm88, 0.0, %v236
  %v248 = vsel %vm88, 0.0, %v238
  %v249 = vsel %vm88, 0.0, %v240
  %v250 = vsel %vm88, 0.0, %v242
  %v251 = vsel %vm91, %v247, 0.0
  %v252 = vsel %vm91, %v248, 0.0
  %v253 = vsel %vm91, %v249, 0.0
  %v254 = vsel %vm91, %v250, 0.0
  %255 = vrot.lane.b32.xlu0 %v227, 127
  %v256 = vpop.permute.xlu0 %255
  %257 = vrot.lane.b32.xlu0 %v228, 127
  %v258 = vpop.permute.xlu0 %257
  %259 = vrot.lane.b32.xlu0 %v229, 127
  %v260 = vpop.permute.xlu0 %259
  %261 = vrot.lane.b32.xlu0 %v230, 127
  %v262 = vpop.permute.xlu0 %261
  %v267 = vsel %vm96, %v256, 0.0
  %v268 = vsel %vm96, %v258, 0.0
  %v269 = vsel %vm96, %v260, 0.0
  %v270 = vsel %vm96, %v262, 0.0
  %v271 = vsel %vm99, %v267, 0.0
  %v272 = vsel %vm99, %v268, 0.0
  %v273 = vsel %vm99, %v269, 0.0
  %v274 = vsel %vm99, %v270, 0.0
  %v275 = vld [vmem:[%s3] sm:$0xff]
  %v276 = vld [vmem:[%s3 + $0x8] sm:$0xff]
  %v277 = vld [vmem:[%s4] sm:$0xff]
  %v278 = vld [vmem:[%s4 + $0x8] sm:$0xff]
  %280 = vset.pattern.permute.xlu0 0
  %281 = vperm.xlu0 %280, %v277
  %v282 = vpop.permute.xlu0 %281
  %285 = vset.pattern.permute.xlu0 0
  %286 = vperm.xlu0 %285, %v278
  %v287 = vpop.permute.xlu0 %286
  %vm289 = vcmask 785408
  %v291 = vsel %vm289, %v275, 0
  %v294 = vsel %vm289, %v276, 0
  %296 = vmatprep.subr.mxu0 0.0
  %297 = vmatpush1.msra.mxu0 %v251
  %298 = vmatprep.subr.mxu0 0.0
  %299 = vmatpush1.msra.mxu0 %v252
  %300 = vmatprep.subr.mxu0 0.0
  %301 = vmatpush1.msra.mxu0 %v253
  %302 = vmatprep.subr.mxu0 0.0
  %303 = vmatpush1.msra.mxu0 %v254
  %304 = vmatprep.subr.mxu0 0.0
  %305 = vmatpush1.msra.mxu0 %v227
  %306 = vmatprep.subr.mxu0 0.0
  %307 = vmatpush1.msra.mxu0 %v228
  %308 = vmatprep.subr.mxu0 0.0
  %309 = vmatpush1.msra.mxu0 %v229
  %310 = vmatprep.subr.mxu0 0.0
  %311 = vmatpush1.msra.mxu0 %v230
  %312 = vmatprep.subr.mxu0 0.0
  %313 = vmatpush1.msra.mxu0 %v271
  %314 = vmatprep.subr.mxu0 0.0
  %315 = vmatpush1.msra.mxu0 %v272
  %316 = vmatprep.subr.mxu0 0.0
  %317 = vmatpush1.msra.mxu0 %v273
  %318 = vmatprep.subr.mxu0 0.0
  %319 = vmatpush1.msra.mxu0 %v274
  %320 = vmatprep.subr.mxu0 0.0
  %321 = vmatpush1.msra.mxu0 0.0
  %322 = vmatprep.subr.mxu0 0.0
  %323 = vmatpush1.msra.mxu0 0.0
  %324 = vmatprep.subr.mxu0 0.0
  %325 = vmatpush1.msra.mxu0 0.0
  %326 = vmatprep.subr.mxu0 0.0
  %327 = vmatpush1.msra.mxu0 0.0
  %328 = vmatprep.subr.mxu0 0.0
  %329 = vmatpush1.msra.mxu0 0.0
  %330 = vmatprep.subr.mxu0 0.0
  %331 = vmatpush1.msra.mxu0 0.0
  %332 = vmatprep.subr.mxu0 0.0
  %333 = vmatpush1.msra.mxu0 0.0
  %334 = vmatprep.subr.mxu0 0.0
  %335 = vmatpush1.msra.mxu0 0.0
  %336 = vmatprep.subr.mxu0 0.0
  %337 = vmatpush1.msra.mxu0 0.0
  %338 = vmatprep.subr.mxu0 0.0
  %339 = vmatpush1.msra.mxu0 0.0
  %340 = vmatprep.subr.mxu0 0.0
  %341 = vmatpush1.msra.mxu0 0.0
  %342 = vmatprep.subr.mxu0 0.0
  %343 = vmatpush1.msra.mxu0 0.0
  %344 = vmatprep.subr.mxu0 0.0
  %345 = vmatpush1.msra.mxu0 0.0
  %346 = vmatprep.subr.mxu0 0.0
  %347 = vmatpush1.msra.mxu0 0.0
  %348 = vmatprep.subr.mxu0 0.0
  %349 = vmatpush1.msra.mxu0 0.0
  %350 = vmatprep.subr.mxu0 0.0
  %351 = vmatpush1.msra.mxu0 0.0
  %352 = vmatprep.subr.mxu0 0.0
  %353 = vmatpush1.msra.mxu0 0.0
  %354 = vmatprep.subr.mxu0 0.0
  %355 = vmatpush1.msra.mxu0 0.0
  %356 = vmatprep.subr.mxu0 0.0
  %357 = vmatpush1.msra.mxu0 0.0
  %358 = vmatprep.subr.mxu0 0.0
  %359 = vmatpush1.msra.mxu0 0.0
  %360 = vmatprep.mubr.f32.mxu0 0.0
  %361 = vmatmul.mubr.f32.gmra.mrb[0].mxu0 %v291
  %v362 = vpop.f32.mrb[0].mxu0
  %v363 = vadd.f32 %v282, %v362
  %v364 = vpop.f32.mrb[0].mxu0
  %365 = vmatprep.mubr.f32.mxu0 0.0
  %366 = vmatmul.mubr.f32.gmra.mrb[0].mxu0 %v294
  %v367 = vpop.f32.mrb[0].mxu0
  %v368 = vadd.f32 %v287, %v367
  %v369 = vpop.f32.mrb[0].mxu0
  %370 = vdwg.mxu0
  %v371 = vmax.f32 %v363, 0.0
  %v372 = vmax.f32 %v368, 0.0
  %v373 = vld [vmem:[%s5] sm:$0xff]
  %v374 = vld [vmem:[%s5 + $0x8] sm:$0xff]
  %v375 = vld [vmem:[%s5 + $0x10] sm:$0xff]
  %v376 = vld [vmem:[%s5 + $0x18] sm:$0xff]
  %vm377 = vcmask 130048
  %v379 = vsel %vm377, %v373, 0
  %v382 = vsel %vm377, %v374, 0
  %v385 = vsel %vm377, %v375, 0
  %v388 = vsel %vm377, %v376, 0
  %390 = vmatprep.subr.mxu0 0.0
  %391 = vmatpush1.msra.mxu0 %v371
  %392 = vmatprep.subr.mxu0 0.0
  %393 = vmatpush1.msra.mxu0 %v372
  %394 = vmatprep.subr.mxu0 0.0
  %395 = vmatpush1.msra.mxu0 0.0
  %396 = vmatprep.subr.mxu0 0.0
  %397 = vmatpush1.msra.mxu0 0.0
  %398 = vmatprep.subr.mxu0 0.0
  %399 = vmatpush1.msra.mxu0 0.0
  %400 = vmatprep.subr.mxu0 0.0
  %401 = vmatpush1.msra.mxu0 0.0
  %402 = vmatprep.subr.mxu0 0.0
  %403 = vmatpush1.msra.mxu0 0.0
  %404 = vmatprep.subr.mxu0 0.0
  %405 = vmatpush1.msra.mxu0 0.0
  %406 = vmatprep.subr.mxu0 0.0
  %407 = vmatpush1.msra.mxu0 0.0
  %408 = vmatprep.subr.mxu0 0.0
  %409 = vmatpush1.msra.mxu0 0.0
  %410 = vmatprep.subr.mxu0 0.0
  %411 = vmatpush1.msra.mxu0 0.0
  %412 = vmatprep.subr.mxu0 0.0
  %413 = vmatpush1.msra.mxu0 0.0
  %414 = vmatprep.subr.mxu0 0.0
  %415 = vmatpush1.msra.mxu0 0.0
  %416 = vmatprep.subr.mxu0 0.0
  %417 = vmatpush1.msra.mxu0 0.0
  %418 = vmatprep.subr.mxu0 0.0
  %419 = vmatpush1.msra.mxu0 0.0
  %420 = vmatprep.subr.mxu0 0.0
  %421 = vmatpush1.msra.mxu0 0.0
  %422 = vmatprep.subr.mxu0 0.0
  %423 = vmatpush1.msra.mxu0 0.0
  %424 = vmatprep.subr.mxu0 0.0
  %425 = vmatpush1.msra.mxu0 0.0
  %426 = vmatprep.subr.mxu0 0.0
  %427 = vmatpush1.msra.mxu0 0.0
  %428 = vmatprep.subr.mxu0 0.0
  %429 = vmatpush1.msra.mxu0 0.0
  %430 = vmatprep.subr.mxu0 0.0
  %431 = vmatpush1.msra.mxu0 0.0
  %432 = vmatprep.subr.mxu0 0.0
  %433 = vmatpush1.msra.mxu0 0.0
  %434 = vmatprep.subr.mxu0 0.0
  %435 = vmatpush1.msra.mxu0 0.0
  %436 = vmatprep.subr.mxu0 0.0
  %437 = vmatpush1.msra.mxu0 0.0
  %438 = vmatprep.subr.mxu0 0.0
  %439 = vmatpush1.msra.mxu0 0.0
  %440 = vmatprep.subr.mxu0 0.0
  %441 = vmatpush1.msra.mxu0 0.0
  %442 = vmatprep.subr.mxu0 0.0
  %443 = vmatpush1.msra.mxu0 0.0
  %444 = vmatprep.subr.mxu0 0.0
  %445 = vmatpush1.msra.mxu0 0.0
  %446 = vmatprep.subr.mxu0 0.0
  %447 = vmatpush1.msra.mxu0 0.0
  %448 = vmatprep.subr.mxu0 0.0
  %449 = vmatpush1.msra.mxu0 0.0
  %450 = vmatprep.subr.mxu0 0.0
  %451 = vmatpush1.msra.mxu0 0.0
  %452 = vmatprep.subr.mxu0 0.0
  %453 = vmatpush1.msra.mxu0 0.0
  %454 = vmatprep.mubr.f32.mxu0 0.0
  %455 = vmatmul.mubr.f32.gmra.mrb[0].mxu0 %v379
  %v456 = vpop.f32.mrb[0].mxu0
  %v457 = vadd.f32 0.0, %v456
  %v458 = vpop.f32.mrb[0].mxu0
  %459 = vmatprep.mubr.f32.mxu0 0.0
  %460 = vmatmul.mubr.f32.gmra.mrb[0].mxu0 %v382
  %v461 = vpop.f32.mrb[0].mxu0
  %v462 = vadd.f32 0.0, %v461
  %v463 = vpop.f32.mrb[0].mxu0
  %464 = vmatprep.mubr.f32.mxu0 0.0
  %465 = vmatmul.mubr.f32.gmra.mrb[0].mxu0 %v385
  %v466 = vpop.f32.mrb[0].mxu0
  %v467 = vadd.f32 0.0, %v466
  %v468 = vpop.f32.mrb[0].mxu0
  %469 = vmatprep.mubr.f32.mxu0 0.0
  %470 = vmatmul.mubr.f32.gmra.mrb[0].mxu0 %v388
  %v471 = vpop.f32.mrb[0].mxu0
  %v472 = vadd.f32 0.0, %v471
  %v473 = vpop.f32.mrb[0].mxu0
  %474 = vdwg.mxu0
  %v475 = vadd.f32 %v209, %v457
  %v476 = vadd.f32 %v214, %v462
  %v477 = vadd.f32 %v219, %v467
  %v478 = vadd.f32 %v224, %v472
  %v479 = vld [vmem:[%s6] sm:$0xff]
  %v480 = vld [vmem:[%s6 + $0x8] sm:$0xff]
  %v481 = vld [vmem:[%s6 + $0x10] sm:$0xff]
  %v482 = vld [vmem:[%s6 + $0x18] sm:$0xff]
  %484 = vset.pattern.permute.xlu0 0
  %485 = vperm.xlu0 %484, %v479
  %v486 = vpop.permute.xlu0 %485
  %489 = vset.pattern.permute.xlu0 0
  %490 = vperm.xlu0 %489, %v480
  %v491 = vpop.permute.xlu0 %490
  %494 = vset.pattern.permute.xlu0 0
  %495 = vperm.xlu0 %494, %v481
  %v496 = vpop.permute.xlu0 %495
  %499 = vset.pattern.permute.xlu0 0
  %500 = vperm.xlu0 %499, %v482
  %v501 = vpop.permute.xlu0 %500
  %v503 = vadd.f32 %v475, %v486
  %v504 = vadd.f32 %v476, %v491
  %v505 = vadd.f32 %v477, %v496
  %v506 = vadd.f32 %v478, %v501
  %v507 = vmax.f32 %v503, 0.0
  %v508 = vmax.f32 %v504, 0.0
  %v509 = vmax.f32 %v505, 0.0
  %v510 = vmax.f32 %v506, 0.0
  %515 = vrot.lane.b32.xlu0 %v507, 1
  %v516 = vpop.permute.xlu0 %515
  %517 = vrot.lane.b32.xlu0 %v508, 1
  %v518 = vpop.permute.xlu0 %517
  %519 = vrot.lane.b32.xlu0 %v509, 1
  %v520 = vpop.permute.xlu0 %519
  %521 = vrot.lane.b32.xlu0 %v510, 1
  %v522 = vpop.permute.xlu0 %521
  %v527 = vsel %vm88, 0.0, %v516
  %v528 = vsel %vm88, 0.0, %v518
  %v529 = vsel %vm88, 0.0, %v520
  %v530 = vsel %vm88, 0.0, %v522
  %v531 = vsel %vm91, %v527, 0.0
  %v532 = vsel %vm91, %v528, 0.0
  %v533 = vsel %vm91, %v529, 0.0
  %v534 = vsel %vm91, %v530, 0.0
  %535 = vrot.lane.b32.xlu0 %v507, 127
  %v536 = vpop.permute.xlu0 %535
  %537 = vrot.lane.b32.xlu0 %v508, 127
  %v538 = vpop.permute.xlu0 %537
  %539 = vrot.lane.b32.xlu0 %v509, 127
  %v540 = vpop.permute.xlu0 %539
  %541 = vrot.lane.b32.xlu0 %v510, 127
  %v542 = vpop.permute.xlu0 %541
  %v547 = vsel %vm96, %v536, 0.0
  %v548 = vsel %vm96, %v538, 0.0
  %v549 = vsel %vm96, %v540, 0.0
  %v550 = vsel %vm96, %v542, 0.0
  %v551 = vsel %vm99, %v547, 0.0
  %v552 = vsel %vm99, %v548, 0.0
  %v553 = vsel %vm99, %v549, 0.0
  %v554 = vsel %vm99, %v550, 0.0
  %v555 = vld [vmem:[%s7] sm:$0xff]
  %v556 = vld [vmem:[%s7 + $0x8] sm:$0xff]
  %v557 = vld [vmem:[%s8] sm:$0xff]
  %v558 = vld [vmem:[%s8 + $0x8] sm:$0xff]
  %560 = vset.pattern.permute.xlu0 0
  %561 = vperm.xlu0 %560, %v557
  %v562 = vpop.permute.xlu0 %561
  %565 = vset.pattern.permute.xlu0 0
  %566 = vperm.xlu0 %565, %v558
  %v567 = vpop.permute.xlu0 %566
  %v570 = vsel %vm289, %v555, 0
  %v573 = vsel %vm289, %v556, 0
  %575 = vmatprep.subr.mxu0 0.0
  %576 = vmatpush1.msra.mxu0 %v531
  %577 = vmatprep.subr.mxu0 0.0
  %578 = vmatpush1.msra.mxu0 %v532
  %579 = vmatprep.subr.mxu0 0.0
  %580 = vmatpush1.msra.mxu0 %v533
  %581 = vmatprep.subr.mxu0 0.0
  %582 = vmatpush1.msra.mxu0 %v534
  %583 = vmatprep.subr.mxu0 0.0
  %584 = vmatpush1.msra.mxu0 %v507
  %585 = vmatprep.subr.mxu0 0.0
  %586 = vmatpush1.msra.mxu0 %v508
  %587 = vmatprep.subr.mxu0 0.0
  %588 = vmatpush1.msra.mxu0 %v509
  %589 = vmatprep.subr.mxu0 0.0
  %590 = vmatpush1.msra.mxu0 %v510
  %591 = vmatprep.subr.mxu0 0.0
  %592 = vmatpush1.msra.mxu0 %v551
  %593 = vmatprep.subr.mxu0 0.0
  %594 = vmatpush1.msra.mxu0 %v552
  %595 = vmatprep.subr.mxu0 0.0
  %596 = vmatpush1.msra.mxu0 %v553
  %597 = vmatprep.subr.mxu0 0.0
  %598 = vmatpush1.msra.mxu0 %v554
  %599 = vmatprep.subr.mxu0 0.0
  %600 = vmatpush1.msra.mxu0 0.0
  %601 = vmatprep.subr.mxu0 0.0
  %602 = vmatpush1.msra.mxu0 0.0
  %603 = vmatprep.subr.mxu0 0.0
  %604 = vmatpush1.msra.mxu0 0.0
  %605 = vmatprep.subr.mxu0 0.0
  %606 = vmatpush1.msra.mxu0 0.0
  %607 = vmatprep.subr.mxu0 0.0
  %608 = vmatpush1.msra.mxu0 0.0
  %609 = vmatprep.subr.mxu0 0.0
  %610 = vmatpush1.msra.mxu0 0.0
  %611 = vmatprep.subr.mxu0 0.0
  %612 = vmatpush1.msra.mxu0 0.0
  %613 = vmatprep.subr.mxu0 0.0
  %614 = vmatpush1.msra.mxu0 0.0
  %615 = vmatprep.subr.mxu0 0.0
  %616 = vmatpush1.msra.mxu0 0.0
  %617 = vmatprep.subr.mxu0 0.0
  %618 = vmatpush1.msra.mxu0 0.0
  %619 = vmatprep.subr.mxu0 0.0
  %620 = vmatpush1.msra.mxu0 0.0
  %621 = vmatprep.subr.mxu0 0.0
  %622 = vmatpush1.msra.mxu0 0.0
  %623 = vmatprep.subr.mxu0 0.0
  %624 = vmatpush1.msra.mxu0 0.0
  %625 = vmatprep.subr.mxu0 0.0
  %626 = vmatpush1.msra.mxu0 0.0
  %627 = vmatprep.subr.mxu0 0.0
  %628 = vmatpush1.msra.mxu0 0.0
  %629 = vmatprep.subr.mxu0 0.0
  %630 = vmatpush1.msra.mxu0 0.0
  %631 = vmatprep.subr.mxu0 0.0
  %632 = vmatpush1.msra.mxu0 0.0
  %633 = vmatprep.subr.mxu0 0.0
  %634 = vmatpush1.msra.mxu0 0.0
  %635 = vmatprep.subr.mxu0 0.0
  %636 = vmatpush1.msra.mxu0 0.0
  %637 = vmatprep.subr.mxu0 0.0
  %638 = vmatpush1.msra.mxu0 0.0
  %639 = vmatprep.mubr.f32.mxu0 0.0
  %640 = vmatmul.mubr.f32.gmra.mrb[0].mxu0 %v570
  %v641 = vpop.f32.mrb[0].mxu0
  %v642 = vadd.f32 %v562, %v641
  %v643 = vpop.f32.mrb[0].mxu0
  %644 = vmatprep.mubr.f32.mxu0 0.0
  %645 = vmatmul.mubr.f32.gmra.mrb[0].mxu0 %v573
  %v646 = vpop.f32.mrb[0].mxu0
  %v647 = vadd.f32 %v567, %v646
  %v648 = vpop.f32.mrb[0].mxu0
  %649 = vdwg.mxu0
  %v650 = vmax.f32 %v642, 0.0
  %v651 = vmax.f32 %v647, 0.0
  %v652 = vld [vmem:[%s9] sm:$0xff]
  %v653 = vld [vmem:[%s9 + $0x8] sm:$0xff]
  %v654 = vld [vmem:[%s9 + $0x10] sm:$0xff]
  %v655 = vld [vmem:[%s9 + $0x18] sm:$0xff]
  %v657 = vsel %vm377, %v652, 0
  %v660 = vsel %vm377, %v653, 0
  %v663 = vsel %vm377, %v654, 0
  %v666 = vsel %vm377, %v655, 0
  %668 = vmatprep.subr.mxu0 0.0
  %669 = vmatpush1.msra.mxu0 %v650
  %670 = vmatprep.subr.mxu0 0.0
  %671 = vmatpush1.msra.mxu0 %v651
  %672 = vmatprep.subr.mxu0 0.0
  %673 = vmatpush1.msra.mxu0 0.0
  %674 = vmatprep.subr.mxu0 0.0
  %675 = vmatpush1.msra.mxu0 0.0
  %676 = vmatprep.subr.mxu0 0.0
  %677 = vmatpush1.msra.mxu0 0.0
  %678 = vmatprep.subr.mxu0 0.0
  %679 = vmatpush1.msra.mxu0 0.0
  %680 = vmatprep.subr.mxu0 0.0
  %681 = vmatpush1.msra.mxu0 0.0
  %682 = vmatprep.subr.mxu0 0.0
  %683 = vmatpush1.msra.mxu0 0.0
  %684 = vmatprep.subr.mxu0 0.0
  %685 = vmatpush1.msra.mxu0 0.0
  %686 = vmatprep.subr.mxu0 0.0
  %687 = vmatpush1.msra.mxu0 0.0
  %688 = vmatprep.subr.mxu0 0.0
  %689 = vmatpush1.msra.mxu0 0.0
  %690 = vmatprep.subr.mxu0 0.0
  %691 = vmatpush1.msra.mxu0 0.0
  %692 = vmatprep.subr.mxu0 0.0
  %693 = vmatpush1.msra.mxu0 0.0
  %694 = vmatprep.subr.mxu0 0.0
  %695 = vmatpush1.msra.mxu0 0.0
  %696 = vmatprep.subr.mxu0 0.0
  %697 = vmatpush1.msra.mxu0 0.0
  %698 = vmatprep.subr.mxu0 0.0
  %699 = vmatpush1.msra.mxu0 0.0
  %700 = vmatprep.subr.mxu0 0.0
  %701 = vmatpush1.msra.mxu0 0.0
  %702 = vmatprep.subr.mxu0 0.0
  %703 = vmatpush1.msra.mxu0 0.0
  %704 = vmatprep.subr.mxu0 0.0
  %705 = vmatpush1.msra.mxu0 0.0
  %706 = vmatprep.subr.mxu0 0.0
  %707 = vmatpush1.msra.mxu0 0.0
  %708 = vmatprep.subr.mxu0 0.0
  %709 = vmatpush1.msra.mxu0 0.0
  %710 = vmatprep.subr.mxu0 0.0
  %711 = vmatpush1.msra.mxu0 0.0
  %712 = vmatprep.subr.mxu0 0.0
  %713 = vmatpush1.msra.mxu0 0.0
  %714 = vmatprep.subr.mxu0 0.0
  %715 = vmatpush1.msra.mxu0 0.0
  %716 = vmatprep.subr.mxu0 0.0
  %717 = vmatpush1.msra.mxu0 0.0
  %718 = vmatprep.subr.mxu0 0.0
  %719 = vmatpush1.msra.mxu0 0.0
  %720 = vmatprep.subr.mxu0 0.0
  %721 = vmatpush1.msra.mxu0 0.0
  %722 = vmatprep.subr.mxu0 0.0
  %723 = vmatpush1.msra.mxu0 0.0
  %724 = vmatprep.subr.mxu0 0.0
  %725 = vmatpush1.msra.mxu0 0.0
  %726 = vmatprep.subr.mxu0 0.0
  %727 = vmatpush1.msra.mxu0 0.0
  %728 = vmatprep.subr.mxu0 0.0
  %729 = vmatpush1.msra.mxu0 0.0
  %730 = vmatprep.subr.mxu0 0.0
  %731 = vmatpush1.msra.mxu0 0.0
  %732 = vmatprep.mubr.f32.mxu0 0.0
  %733 = vmatmul.mubr.f32.gmra.mrb[0].mxu0 %v657
  %v734 = vpop.f32.mrb[0].mxu0
  %v735 = vadd.f32 0.0, %v734
  %v736 = vpop.f32.mrb[0].mxu0
  %737 = vmatprep.mubr.f32.mxu0 0.0
  %738 = vmatmul.mubr.f32.gmra.mrb[0].mxu0 %v660
  %v739 = vpop.f32.mrb[0].mxu0
  %v740 = vadd.f32 0.0, %v739
  %v741 = vpop.f32.mrb[0].mxu0
  %742 = vmatprep.mubr.f32.mxu0 0.0
  %743 = vmatmul.mubr.f32.gmra.mrb[0].mxu0 %v663
  %v744 = vpop.f32.mrb[0].mxu0
  %v745 = vadd.f32 0.0, %v744
  %v746 = vpop.f32.mrb[0].mxu0
  %747 = vmatprep.mubr.f32.mxu0 0.0
  %748 = vmatmul.mubr.f32.gmra.mrb[0].mxu0 %v666
  %v749 = vpop.f32.mrb[0].mxu0
  %v750 = vadd.f32 0.0, %v749
  %v751 = vpop.f32.mrb[0].mxu0
  %752 = vdwg.mxu0
  %v753 = vadd.f32 %v503, %v735
  %v754 = vadd.f32 %v504, %v740
  %v755 = vadd.f32 %v505, %v745
  %v756 = vadd.f32 %v506, %v750
  %v757 = vld [vmem:[%s10] sm:$0xff]
  %v758 = vld [vmem:[%s10 + $0x8] sm:$0xff]
  %v759 = vld [vmem:[%s10 + $0x10] sm:$0xff]
  %v760 = vld [vmem:[%s10 + $0x18] sm:$0xff]
  %762 = vset.pattern.permute.xlu0 0
  %763 = vperm.xlu0 %762, %v757
  %v764 = vpop.permute.xlu0 %763
  %767 = vset.pattern.permute.xlu0 0
  %768 = vperm.xlu0 %767, %v758
  %v769 = vpop.permute.xlu0 %768
  %772 = vset.pattern.permute.xlu0 0
  %773 = vperm.xlu0 %772, %v759
  %v774 = vpop.permute.xlu0 %773
  %777 = vset.pattern.permute.xlu0 0
  %778 = vperm.xlu0 %777, %v760
  %v779 = vpop.permute.xlu0 %778
  %v781 = vadd.f32 %v753, %v764
  %v782 = vadd.f32 %v754, %v769
  %v783 = vadd.f32 %v755, %v774
  %v784 = vadd.f32 %v756, %v779
  %v785 = vmax.f32 %v781, 0.0
  %v786 = vmax.f32 %v782, 0.0
  %v787 = vmax.f32 %v783, 0.0
  %v788 = vmax.f32 %v784, 0.0
  %793 = vrot.lane.b32.xlu0 %v785, 1
  %v794 = vpop.permute.xlu0 %793
  %795 = vrot.lane.b32.xlu0 %v786, 1
  %v796 = vpop.permute.xlu0 %795
  %797 = vrot.lane.b32.xlu0 %v787, 1
  %v798 = vpop.permute.xlu0 %797
  %799 = vrot.lane.b32.xlu0 %v788, 1
  %v800 = vpop.permute.xlu0 %799
  %v805 = vsel %vm88, 0.0, %v794
  %v806 = vsel %vm88, 0.0, %v796
  %v807 = vsel %vm88, 0.0, %v798
  %v808 = vsel %vm88, 0.0, %v800
  %v809 = vsel %vm91, %v805, 0.0
  %v810 = vsel %vm91, %v806, 0.0
  %v811 = vsel %vm91, %v807, 0.0
  %v812 = vsel %vm91, %v808, 0.0
  %813 = vrot.lane.b32.xlu0 %v785, 127
  %v814 = vpop.permute.xlu0 %813
  %815 = vrot.lane.b32.xlu0 %v786, 127
  %v816 = vpop.permute.xlu0 %815
  %817 = vrot.lane.b32.xlu0 %v787, 127
  %v818 = vpop.permute.xlu0 %817
  %819 = vrot.lane.b32.xlu0 %v788, 127
  %v820 = vpop.permute.xlu0 %819
  %v825 = vsel %vm96, %v814, 0.0
  %v826 = vsel %vm96, %v816, 0.0
  %v827 = vsel %vm96, %v818, 0.0
  %v828 = vsel %vm96, %v820, 0.0
  %v829 = vsel %vm99, %v825, 0.0
  %v830 = vsel %vm99, %v826, 0.0
  %v831 = vsel %vm99, %v827, 0.0
  %v832 = vsel %vm99, %v828, 0.0
  %v833 = vld [vmem:[%s11] sm:$0xff]
  %v834 = vld [vmem:[%s11 + $0x8] sm:$0xff]
  %v835 = vld [vmem:[%s11 + $0x10] sm:$0xff]
  %v836 = vld [vmem:[%s11 + $0x18] sm:$0xff]
  %v837 = vld [vmem:[%s13] sm:$0xff]
  %v838 = vld [vmem:[%s13 + $0x8] sm:$0xff]
  %v839 = vld [vmem:[%s13 + $0x10] sm:$0xff]
  %v840 = vld [vmem:[%s13 + $0x18] sm:$0xff]
  %842 = vset.pattern.permute.xlu0 0
  %843 = vperm.xlu0 %842, %v837
  %v844 = vpop.permute.xlu0 %843
  %847 = vset.pattern.permute.xlu0 0
  %848 = vperm.xlu0 %847, %v838
  %v849 = vpop.permute.xlu0 %848
  %852 = vset.pattern.permute.xlu0 0
  %853 = vperm.xlu0 %852, %v839
  %v854 = vpop.permute.xlu0 %853
  %857 = vset.pattern.permute.xlu0 0
  %858 = vperm.xlu0 %857, %v840
  %v859 = vpop.permute.xlu0 %858
  %vm861 = vcmask 523264
  %v863 = vsel %vm861, %v833, 0
  %v866 = vsel %vm861, %v834, 0
  %v869 = vsel %vm861, %v835, 0
  %v872 = vsel %vm861, %v836, 0
  %874 = vmatprep.subr.mxu0 0.0
  %875 = vmatpush1.msra.mxu0 %v785
  %876 = vmatprep.subr.mxu0 0.0
  %877 = vmatpush1.msra.mxu0 %v786
  %878 = vmatprep.subr.mxu0 0.0
  %879 = vmatpush1.msra.mxu0 %v787
  %880 = vmatprep.subr.mxu0 0.0
  %881 = vmatpush1.msra.mxu0 %v788
  %882 = vmatprep.subr.mxu0 0.0
  %883 = vmatpush1.msra.mxu0 %v809
  %884 = vmatprep.subr.mxu0 0.0
  %885 = vmatpush1.msra.mxu0 %v810
  %886 = vmatprep.subr.mxu0 0.0
  %887 = vmatpush1.msra.mxu0 %v811
  %888 = vmatprep.subr.mxu0 0.0
  %889 = vmatpush1.msra.mxu0 %v812
  %890 = vmatprep.subr.mxu0 0.0
  %891 = vmatpush1.msra.mxu0 0.0
  %892 = vmatprep.subr.mxu0 0.0
  %893 = vmatpush1.msra.mxu0 0.0
  %894 = vmatprep.subr.mxu0 0.0
  %895 = vmatpush1.msra.mxu0 0.0
  %896 = vmatprep.subr.mxu0 0.0
  %897 = vmatpush1.msra.mxu0 0.0
  %898 = vmatprep.subr.mxu0 0.0
  %899 = vmatpush1.msra.mxu0 0.0
  %900 = vmatprep.subr.mxu0 0.0
  %901 = vmatpush1.msra.mxu0 0.0
  %902 = vmatprep.subr.mxu0 0.0
  %903 = vmatpush1.msra.mxu0 0.0
  %904 = vmatprep.subr.mxu0 0.0
  %905 = vmatpush1.msra.mxu0 0.0
  %906 = vmatprep.subr.mxu0 0.0
  %907 = vmatpush1.msra.mxu0 0.0
  %908 = vmatprep.subr.mxu0 0.0
  %909 = vmatpush1.msra.mxu0 0.0
  %910 = vmatprep.subr.mxu0 0.0
  %911 = vmatpush1.msra.mxu0 0.0
  %912 = vmatprep.subr.mxu0 0.0
  %913 = vmatpush1.msra.mxu0 0.0
  %914 = vmatprep.subr.mxu0 0.0
  %915 = vmatpush1.msra.mxu0 0.0
  %916 = vmatprep.subr.mxu0 0.0
  %917 = vmatpush1.msra.mxu0 0.0
  %918 = vmatprep.subr.mxu0 0.0
  %919 = vmatpush1.msra.mxu0 0.0
  %920 = vmatprep.subr.mxu0 0.0
  %921 = vmatpush1.msra.mxu0 0.0
  %922 = vmatprep.subr.mxu0 0.0
  %923 = vmatpush1.msra.mxu0 0.0
  %924 = vmatprep.subr.mxu0 0.0
  %925 = vmatpush1.msra.mxu0 0.0
  %926 = vmatprep.subr.mxu0 0.0
  %927 = vmatpush1.msra.mxu0 0.0
  %928 = vmatprep.subr.mxu0 0.0
  %929 = vmatpush1.msra.mxu0 0.0
  %930 = vmatprep.subr.mxu0 0.0
  %931 = vmatpush1.msra.mxu0 0.0
  %932 = vmatprep.subr.mxu0 0.0
  %933 = vmatpush1.msra.mxu0 0.0
  %934 = vmatprep.subr.mxu0 0.0
  %935 = vmatpush1.msra.mxu0 0.0
  %936 = vmatprep.subr.mxu0 0.0
  %937 = vmatpush1.msra.mxu0 0.0
  %938 = vmatprep.mubr.f32.mxu0 0.0
  %939 = vmatmul.mubr.f32.gmra.mrb[0].mxu0 %v863
  %v940 = vpop.f32.mrb[0].mxu0
  %v941 = vadd.f32 %v844, %v940
  %v942 = vpop.f32.mrb[0].mxu0
  %943 = vmatprep.mubr.f32.mxu0 0.0
  %944 = vmatmul.mubr.f32.gmra.mrb[0].mxu0 %v866
  %v945 = vpop.f32.mrb[0].mxu0
  %v946 = vadd.f32 %v849, %v945
  %v947 = vpop.f32.mrb[0].mxu0
  %948 = vmatprep.mubr.f32.mxu0 0.0
  %949 = vmatmul.mubr.f32.gmra.mrb[0].mxu0 %v869
  %v950 = vpop.f32.mrb[0].mxu0
  %v951 = vadd.f32 %v854, %v950
  %v952 = vpop.f32.mrb[0].mxu0
  %953 = vmatprep.mubr.f32.mxu0 0.0
  %954 = vmatmul.mubr.f32.gmra.mrb[0].mxu0 %v872
  %v955 = vpop.f32.mrb[0].mxu0
  %v956 = vadd.f32 %v859, %v955
  %v957 = vpop.f32.mrb[0].mxu0
  %958 = vdwg.mxu0
  %v959 = vld [vmem:[%s12] sm:$0xff]
  %v960 = vld [vmem:[%s12 + $0x8] sm:$0xff]
  %v961 = vld [vmem:[%s12 + $0x10] sm:$0xff]
  %v962 = vld [vmem:[%s12 + $0x18] sm:$0xff]
  %v964 = vsel %vm861, %v959, 0
  %v967 = vsel %vm861, %v960, 0
  %v970 = vsel %vm861, %v961, 0
  %v973 = vsel %vm861, %v962, 0
  %975 = vmatprep.subr.mxu0 0.0
  %976 = vmatpush1.msra.mxu0 %v785
  %977 = vmatprep.subr.mxu0 0.0
  %978 = vmatpush1.msra.mxu0 %v786
  %979 = vmatprep.subr.mxu0 0.0
  %980 = vmatpush1.msra.mxu0 %v787
  %981 = vmatprep.subr.mxu0 0.0
  %982 = vmatpush1.msra.mxu0 %v788
  %983 = vmatprep.subr.mxu0 0.0
  %984 = vmatpush1.msra.mxu0 %v829
  %985 = vmatprep.subr.mxu0 0.0
  %986 = vmatpush1.msra.mxu0 %v830
  %987 = vmatprep.subr.mxu0 0.0
  %988 = vmatpush1.msra.mxu0 %v831
  %989 = vmatprep.subr.mxu0 0.0
  %990 = vmatpush1.msra.mxu0 %v832
  %991 = vmatprep.subr.mxu0 0.0
  %992 = vmatpush1.msra.mxu0 0.0
  %993 = vmatprep.subr.mxu0 0.0
  %994 = vmatpush1.msra.mxu0 0.0
  %995 = vmatprep.subr.mxu0 0.0
  %996 = vmatpush1.msra.mxu0 0.0
  %997 = vmatprep.subr.mxu0 0.0
  %998 = vmatpush1.msra.mxu0 0.0
  %999 = vmatprep.subr.mxu0 0.0
  %1000 = vmatpush1.msra.mxu0 0.0
  %1001 = vmatprep.subr.mxu0 0.0
  %1002 = vmatpush1.msra.mxu0 0.0
  %1003 = vmatprep.subr.mxu0 0.0
  %1004 = vmatpush1.msra.mxu0 0.0
  %1005 = vmatprep.subr.mxu0 0.0
  %1006 = vmatpush1.msra.mxu0 0.0
  %1007 = vmatprep.subr.mxu0 0.0
  %1008 = vmatpush1.msra.mxu0 0.0
  %1009 = vmatprep.subr.mxu0 0.0
  %1010 = vmatpush1.msra.mxu0 0.0
  %1011 = vmatprep.subr.mxu0 0.0
  %1012 = vmatpush1.msra.mxu0 0.0
  %1013 = vmatprep.subr.mxu0 0.0
  %1014 = vmatpush1.msra.mxu0 0.0
  %1015 = vmatprep.subr.mxu0 0.0
  %1016 = vmatpush1.msra.mxu0 0.0
  %1017 = vmatprep.subr.mxu0 0.0
  %1018 = vmatpush1.msra.mxu0 0.0
  %1019 = vmatprep.subr.mxu0 0.0
  %1020 = vmatpush1.msra.mxu0 0.0
  %1021 = vmatprep.subr.mxu0 0.0
  %1022 = vmatpush1.msra.mxu0 0.0
  %1023 = vmatprep.subr.mxu0 0.0
  %1024 = vmatpush1.msra.mxu0 0.0
  %1025 = vmatprep.subr.mxu0 0.0
  %1026 = vmatpush1.msra.mxu0 0.0
  %1027 = vmatprep.subr.mxu0 0.0
  %1028 = vmatpush1.msra.mxu0 0.0
  %1029 = vmatprep.subr.mxu0 0.0
  %1030 = vmatpush1.msra.mxu0 0.0
  %1031 = vmatprep.subr.mxu0 0.0
  %1032 = vmatpush1.msra.mxu0 0.0
  %1033 = vmatprep.subr.mxu0 0.0
  %1034 = vmatpush1.msra.mxu0 0.0
  %1035 = vmatprep.subr.mxu0 0.0
  %1036 = vmatpush1.msra.mxu0 0.0
  %1037 = vmatprep.subr.mxu0 0.0
  %1038 = vmatpush1.msra.mxu0 0.0
  %1039 = vmatprep.mubr.f32.mxu0 0.0
  %1040 = vmatmul.mubr.f32.gmra.mrb[0].mxu0 %v964
  %v1041 = vpop.f32.mrb[0].mxu0
  %v1042 = vadd.f32 %v844, %v1041
  %v1043 = vpop.f32.mrb[0].mxu0
  %1044 = vmatprep.mubr.f32.mxu0 0.0
  %1045 = vmatmul.mubr.f32.gmra.mrb[0].mxu0 %v967
  %v1046 = vpop.f32.mrb[0].mxu0
  %v1047 = vadd.f32 %v849, %v1046
  %v1048 = vpop.f32.mrb[0].mxu0
  %1049 = vmatprep.mubr.f32.mxu0 0.0
  %1050 = vmatmul.mubr.f32.gmra.mrb[0].mxu0 %v970
  %v1051 = vpop.f32.mrb[0].mxu0
  %v1052 = vadd.f32 %v854, %v1051
  %v1053 = vpop.f32.mrb[0].mxu0
  %1054 = vmatprep.mubr.f32.mxu0 0.0
  %1055 = vmatmul.mubr.f32.gmra.mrb[0].mxu0 %v973
  %v1056 = vpop.f32.mrb[0].mxu0
  %v1057 = vadd.f32 %v859, %v1056
  %v1058 = vpop.f32.mrb[0].mxu0
  %1059 = vdwg.mxu0
  %v1060 = vmax.f32 %v941, 0.0
  %v1061 = vmax.f32 %v946, 0.0
  %v1062 = vmax.f32 %v951, 0.0
  %v1063 = vmax.f32 %v956, 0.0
  %v1064 = vmax.f32 %v1042, 0.0
  %v1065 = vmax.f32 %v1047, 0.0
  %v1066 = vmax.f32 %v1052, 0.0
  %v1067 = vmax.f32 %v1057, 0.0
  %1072 = vrot.lane.b32.xlu0 %v1064, 1
  %v1073 = vpop.permute.xlu0 %1072
  %1074 = vrot.lane.b32.xlu0 %v1065, 1
  %v1075 = vpop.permute.xlu0 %1074
  %1076 = vrot.lane.b32.xlu0 %v1066, 1
  %v1077 = vpop.permute.xlu0 %1076
  %1078 = vrot.lane.b32.xlu0 %v1067, 1
  %v1079 = vpop.permute.xlu0 %1078
  %v1084 = vsel %vm88, 0.0, %v1073
  %v1085 = vsel %vm88, 0.0, %v1075
  %v1086 = vsel %vm88, 0.0, %v1077
  %v1087 = vsel %vm88, 0.0, %v1079
  %v1088 = vsel %vm91, %v1084, 0.0
  %v1089 = vsel %vm91, %v1085, 0.0
  %v1090 = vsel %vm91, %v1086, 0.0
  %v1091 = vsel %vm91, %v1087, 0.0
  %v1092 = vld [vmem:[%s14] sm:$0xff]
  %v1093 = vld [vmem:[%s14 + $0x8] sm:$0xff]
  %v1094 = vld [vmem:[%s16] sm:$0xff]
  %v1095 = vld [vmem:[%s16 + $0x8] sm:$0xff]
  %1097 = vset.pattern.permute.xlu0 0
  %1098 = vperm.xlu0 %1097, %v1094
  %v1099 = vpop.permute.xlu0 %1098
  %1102 = vset.pattern.permute.xlu0 0
  %1103 = vperm.xlu0 %1102, %v1095
  %v1104 = vpop.permute.xlu0 %1103
  %v1107 = vsel %vm861, %v1092, 0
  %v1110 = vsel %vm861, %v1093, 0
  %1112 = vmatprep.subr.mxu0 0.0
  %1113 = vmatpush1.msra.mxu0 %v1060
  %1114 = vmatprep.subr.mxu0 0.0
  %1115 = vmatpush1.msra.mxu0 %v1061
  %1116 = vmatprep.subr.mxu0 0.0
  %1117 = vmatpush1.msra.mxu0 %v1062
  %1118 = vmatprep.subr.mxu0 0.0
  %1119 = vmatpush1.msra.mxu0 %v1063
  %1120 = vmatprep.subr.mxu0 0.0
  %1121 = vmatpush1.msra.mxu0 %v1088
  %1122 = vmatprep.subr.mxu0 0.0
  %1123 = vmatpush1.msra.mxu0 %v1089
  %1124 = vmatprep.subr.mxu0 0.0
  %1125 = vmatpush1.msra.mxu0 %v1090
  %1126 = vmatprep.subr.mxu0 0.0
  %1127 = vmatpush1.msra.mxu0 %v1091
  %1128 = vmatprep.subr.mxu0 0.0
  %1129 = vmatpush1.msra.mxu0 0.0
  %1130 = vmatprep.subr.mxu0 0.0
  %1131 = vmatpush1.msra.mxu0 0.0
  %1132 = vmatprep.subr.mxu0 0.0
  %1133 = vmatpush1.msra.mxu0 0.0
  %1134 = vmatprep.subr.mxu0 0.0
  %1135 = vmatpush1.msra.mxu0 0.0
  %1136 = vmatprep.subr.mxu0 0.0
  %1137 = vmatpush1.msra.mxu0 0.0
  %1138 = vmatprep.subr.mxu0 0.0
  %1139 = vmatpush1.msra.mxu0 0.0
  %1140 = vmatprep.subr.mxu0 0.0
  %1141 = vmatpush1.msra.mxu0 0.0
  %1142 = vmatprep.subr.mxu0 0.0
  %1143 = vmatpush1.msra.mxu0 0.0
  %1144 = vmatprep.subr.mxu0 0.0
  %1145 = vmatpush1.msra.mxu0 0.0
  %1146 = vmatprep.subr.mxu0 0.0
  %1147 = vmatpush1.msra.mxu0 0.0
  %1148 = vmatprep.subr.mxu0 0.0
  %1149 = vmatpush1.msra.mxu0 0.0
  %1150 = vmatprep.subr.mxu0 0.0
  %1151 = vmatpush1.msra.mxu0 0.0
  %1152 = vmatprep.subr.mxu0 0.0
  %1153 = vmatpush1.msra.mxu0 0.0
  %1154 = vmatprep.subr.mxu0 0.0
  %1155 = vmatpush1.msra.mxu0 0.0
  %1156 = vmatprep.subr.mxu0 0.0
  %1157 = vmatpush1.msra.mxu0 0.0
  %1158 = vmatprep.subr.mxu0 0.0
  %1159 = vmatpush1.msra.mxu0 0.0
  %1160 = vmatprep.subr.mxu0 0.0
  %1161 = vmatpush1.msra.mxu0 0.0
  %1162 = vmatprep.subr.mxu0 0.0
  %1163 = vmatpush1.msra.mxu0 0.0
  %1164 = vmatprep.subr.mxu0 0.0
  %1165 = vmatpush1.msra.mxu0 0.0
  %1166 = vmatprep.subr.mxu0 0.0
  %1167 = vmatpush1.msra.mxu0 0.0
  %1168 = vmatprep.subr.mxu0 0.0
  %1169 = vmatpush1.msra.mxu0 0.0
  %1170 = vmatprep.subr.mxu0 0.0
  %1171 = vmatpush1.msra.mxu0 0.0
  %1172 = vmatprep.subr.mxu0 0.0
  %1173 = vmatpush1.msra.mxu0 0.0
  %1174 = vmatprep.subr.mxu0 0.0
  %1175 = vmatpush1.msra.mxu0 0.0
  %1176 = vmatprep.mubr.f32.mxu0 0.0
  %1177 = vmatmul.mubr.f32.gmra.mrb[0].mxu0 %v1107
  %v1178 = vpop.f32.mrb[0].mxu0
  %v1179 = vadd.f32 %v1099, %v1178
  %v1180 = vpop.f32.mrb[0].mxu0
  %1181 = vmatprep.mubr.f32.mxu0 0.0
  %1182 = vmatmul.mubr.f32.gmra.mrb[0].mxu0 %v1110
  %v1183 = vpop.f32.mrb[0].mxu0
  %v1184 = vadd.f32 %v1104, %v1183
  %v1185 = vpop.f32.mrb[0].mxu0
  %1186 = vdwg.mxu0
  %v1187 = vld [vmem:[%s15] sm:$0xff]
  %v1188 = vld [vmem:[%s15 + $0x8] sm:$0xff]
  %v1190 = vsel %vm861, %v1187, 0
  %v1193 = vsel %vm861, %v1188, 0
  %1195 = vmatprep.subr.mxu0 0.0
  %1196 = vmatpush1.msra.mxu0 %v1060
  %1197 = vmatprep.subr.mxu0 0.0
  %1198 = vmatpush1.msra.mxu0 %v1061
  %1199 = vmatprep.subr.mxu0 0.0
  %1200 = vmatpush1.msra.mxu0 %v1062
  %1201 = vmatprep.subr.mxu0 0.0
  %1202 = vmatpush1.msra.mxu0 %v1063
  %1203 = vmatprep.subr.mxu0 0.0
  %1204 = vmatpush1.msra.mxu0 %v1064
  %1205 = vmatprep.subr.mxu0 0.0
  %1206 = vmatpush1.msra.mxu0 %v1065
  %1207 = vmatprep.subr.mxu0 0.0
  %1208 = vmatpush1.msra.mxu0 %v1066
  %1209 = vmatprep.subr.mxu0 0.0
  %1210 = vmatpush1.msra.mxu0 %v1067
  %1211 = vmatprep.subr.mxu0 0.0
  %1212 = vmatpush1.msra.mxu0 0.0
  %1213 = vmatprep.subr.mxu0 0.0
  %1214 = vmatpush1.msra.mxu0 0.0
  %1215 = vmatprep.subr.mxu0 0.0
  %1216 = vmatpush1.msra.mxu0 0.0
  %1217 = vmatprep.subr.mxu0 0.0
  %1218 = vmatpush1.msra.mxu0 0.0
  %1219 = vmatprep.subr.mxu0 0.0
  %1220 = vmatpush1.msra.mxu0 0.0
  %1221 = vmatprep.subr.mxu0 0.0
  %1222 = vmatpush1.msra.mxu0 0.0
  %1223 = vmatprep.subr.mxu0 0.0
  %1224 = vmatpush1.msra.mxu0 0.0
  %1225 = vmatprep.subr.mxu0 0.0
  %1226 = vmatpush1.msra.mxu0 0.0
  %1227 = vmatprep.subr.mxu0 0.0
  %1228 = vmatpush1.msra.mxu0 0.0
  %1229 = vmatprep.subr.mxu0 0.0
  %1230 = vmatpush1.msra.mxu0 0.0
  %1231 = vmatprep.subr.mxu0 0.0
  %1232 = vmatpush1.msra.mxu0 0.0
  %1233 = vmatprep.subr.mxu0 0.0
  %1234 = vmatpush1.msra.mxu0 0.0
  %1235 = vmatprep.subr.mxu0 0.0
  %1236 = vmatpush1.msra.mxu0 0.0
  %1237 = vmatprep.subr.mxu0 0.0
  %1238 = vmatpush1.msra.mxu0 0.0
  %1239 = vmatprep.subr.mxu0 0.0
  %1240 = vmatpush1.msra.mxu0 0.0
  %1241 = vmatprep.subr.mxu0 0.0
  %1242 = vmatpush1.msra.mxu0 0.0
  %1243 = vmatprep.subr.mxu0 0.0
  %1244 = vmatpush1.msra.mxu0 0.0
  %1245 = vmatprep.subr.mxu0 0.0
  %1246 = vmatpush1.msra.mxu0 0.0
  %1247 = vmatprep.subr.mxu0 0.0
  %1248 = vmatpush1.msra.mxu0 0.0
  %1249 = vmatprep.subr.mxu0 0.0
  %1250 = vmatpush1.msra.mxu0 0.0
  %1251 = vmatprep.subr.mxu0 0.0
  %1252 = vmatpush1.msra.mxu0 0.0
  %1253 = vmatprep.subr.mxu0 0.0
  %1254 = vmatpush1.msra.mxu0 0.0
  %1255 = vmatprep.subr.mxu0 0.0
  %1256 = vmatpush1.msra.mxu0 0.0
  %1257 = vmatprep.subr.mxu0 0.0
  %1258 = vmatpush1.msra.mxu0 0.0
  %1259 = vmatprep.mubr.f32.mxu0 0.0
  %1260 = vmatmul.mubr.f32.gmra.mrb[0].mxu0 %v1190
  %v1261 = vpop.f32.mrb[0].mxu0
  %v1262 = vadd.f32 %v1099, %v1261
  %v1263 = vpop.f32.mrb[0].mxu0
  %1264 = vmatprep.mubr.f32.mxu0 0.0
  %1265 = vmatmul.mubr.f32.gmra.mrb[0].mxu0 %v1193
  %v1266 = vpop.f32.mrb[0].mxu0
  %v1267 = vadd.f32 %v1104, %v1266
  %v1268 = vpop.f32.mrb[0].mxu0
  %1269 = vdwg.mxu0
  %v1270 = vmax.f32 %v1179, 0.0
  %v1271 = vmax.f32 %v1184, 0.0
  %v1272 = vmax.f32 %v1262, 0.0
  %v1273 = vmax.f32 %v1267, 0.0
  %1278 = vrot.lane.b32.xlu0 %v1060, 127
  %v1279 = vpop.permute.xlu0 %1278
  %1280 = vrot.lane.b32.xlu0 %v1061, 127
  %v1281 = vpop.permute.xlu0 %1280
  %1282 = vrot.lane.b32.xlu0 %v1062, 127
  %v1283 = vpop.permute.xlu0 %1282
  %1284 = vrot.lane.b32.xlu0 %v1063, 127
  %v1285 = vpop.permute.xlu0 %1284
  %v1290 = vsel %vm96, %v1279, 0.0
  %v1291 = vsel %vm96, %v1281, 0.0
  %v1292 = vsel %vm96, %v1283, 0.0
  %v1293 = vsel %vm96, %v1285, 0.0
  %v1294 = vsel %vm99, %v1290, 0.0
  %v1295 = vsel %vm99, %v1291, 0.0
  %v1296 = vsel %vm99, %v1292, 0.0
  %v1297 = vsel %vm99, %v1293, 0.0
  %1298 = vmatprep.subr.mxu0 0.0
  %1299 = vmatpush1.msra.mxu0 %v1064
  %1300 = vmatprep.subr.mxu0 0.0
  %1301 = vmatpush1.msra.mxu0 %v1065
  %1302 = vmatprep.subr.mxu0 0.0
  %1303 = vmatpush1.msra.mxu0 %v1066
  %1304 = vmatprep.subr.mxu0 0.0
  %1305 = vmatpush1.msra.mxu0 %v1067
  %1306 = vmatprep.subr.mxu0 0.0
  %1307 = vmatpush1.msra.mxu0 %v1060
  %1308 = vmatprep.subr.mxu0 0.0
  %1309 = vmatpush1.msra.mxu0 %v1061
  %1310 = vmatprep.subr.mxu0 0.0
  %1311 = vmatpush1.msra.mxu0 %v1062
  %1312 = vmatprep.subr.mxu0 0.0
  %1313 = vmatpush1.msra.mxu0 %v1063
  %1314 = vmatprep.subr.mxu0 0.0
  %1315 = vmatpush1.msra.mxu0 0.0
  %1316 = vmatprep.subr.mxu0 0.0
  %1317 = vmatpush1.msra.mxu0 0.0
  %1318 = vmatprep.subr.mxu0 0.0
  %1319 = vmatpush1.msra.mxu0 0.0
  %1320 = vmatprep.subr.mxu0 0.0
  %1321 = vmatpush1.msra.mxu0 0.0
  %1322 = vmatprep.subr.mxu0 0.0
  %1323 = vmatpush1.msra.mxu0 0.0
  %1324 = vmatprep.subr.mxu0 0.0
  %1325 = vmatpush1.msra.mxu0 0.0
  %1326 = vmatprep.subr.mxu0 0.0
  %1327 = vmatpush1.msra.mxu0 0.0
  %1328 = vmatprep.subr.mxu0 0.0
  %1329 = vmatpush1.msra.mxu0 0.0
  %1330 = vmatprep.subr.mxu0 0.0
  %1331 = vmatpush1.msra.mxu0 0.0
  %1332 = vmatprep.subr.mxu0 0.0
  %1333 = vmatpush1.msra.mxu0 0.0
  %1334 = vmatprep.subr.mxu0 0.0
  %1335 = vmatpush1.msra.mxu0 0.0
  %1336 = vmatprep.subr.mxu0 0.0
  %1337 = vmatpush1.msra.mxu0 0.0
  %1338 = vmatprep.subr.mxu0 0.0
  %1339 = vmatpush1.msra.mxu0 0.0
  %1340 = vmatprep.subr.mxu0 0.0
  %1341 = vmatpush1.msra.mxu0 0.0
  %1342 = vmatprep.subr.mxu0 0.0
  %1343 = vmatpush1.msra.mxu0 0.0
  %1344 = vmatprep.subr.mxu0 0.0
  %1345 = vmatpush1.msra.mxu0 0.0
  %1346 = vmatprep.subr.mxu0 0.0
  %1347 = vmatpush1.msra.mxu0 0.0
  %1348 = vmatprep.subr.mxu0 0.0
  %1349 = vmatpush1.msra.mxu0 0.0
  %1350 = vmatprep.subr.mxu0 0.0
  %1351 = vmatpush1.msra.mxu0 0.0
  %1352 = vmatprep.subr.mxu0 0.0
  %1353 = vmatpush1.msra.mxu0 0.0
  %1354 = vmatprep.subr.mxu0 0.0
  %1355 = vmatpush1.msra.mxu0 0.0
  %1356 = vmatprep.subr.mxu0 0.0
  %1357 = vmatpush1.msra.mxu0 0.0
  %1358 = vmatprep.subr.mxu0 0.0
  %1359 = vmatpush1.msra.mxu0 0.0
  %1360 = vmatprep.subr.mxu0 0.0
  %1361 = vmatpush1.msra.mxu0 0.0
  %1362 = vmatprep.mubr.f32.mxu0 0.0
  %1363 = vmatmul.mubr.f32.gmra.mrb[0].mxu0 %v1107
  %v1364 = vpop.f32.mrb[0].mxu0
  %v1365 = vadd.f32 %v1099, %v1364
  %v1366 = vpop.f32.mrb[0].mxu0
  %1367 = vmatprep.mubr.f32.mxu0 0.0
  %1368 = vmatmul.mubr.f32.gmra.mrb[0].mxu0 %v1110
  %v1369 = vpop.f32.mrb[0].mxu0
  %v1370 = vadd.f32 %v1104, %v1369
  %v1371 = vpop.f32.mrb[0].mxu0
  %1372 = vdwg.mxu0
  %1373 = vmatprep.subr.mxu0 0.0
  %1374 = vmatpush1.msra.mxu0 %v1064
  %1375 = vmatprep.subr.mxu0 0.0
  %1376 = vmatpush1.msra.mxu0 %v1065
  %1377 = vmatprep.subr.mxu0 0.0
  %1378 = vmatpush1.msra.mxu0 %v1066
  %1379 = vmatprep.subr.mxu0 0.0
  %1380 = vmatpush1.msra.mxu0 %v1067
  %1381 = vmatprep.subr.mxu0 0.0
  %1382 = vmatpush1.msra.mxu0 %v1294
  %1383 = vmatprep.subr.mxu0 0.0
  %1384 = vmatpush1.msra.mxu0 %v1295
  %1385 = vmatprep.subr.mxu0 0.0
  %1386 = vmatpush1.msra.mxu0 %v1296
  %1387 = vmatprep.subr.mxu0 0.0
  %1388 = vmatpush1.msra.mxu0 %v1297
  %1389 = vmatprep.subr.mxu0 0.0
  %1390 = vmatpush1.msra.mxu0 0.0
  %1391 = vmatprep.subr.mxu0 0.0
  %1392 = vmatpush1.msra.mxu0 0.0
  %1393 = vmatprep.subr.mxu0 0.0
  %1394 = vmatpush1.msra.mxu0 0.0
  %1395 = vmatprep.subr.mxu0 0.0
  %1396 = vmatpush1.msra.mxu0 0.0
  %1397 = vmatprep.subr.mxu0 0.0
  %1398 = vmatpush1.msra.mxu0 0.0
  %1399 = vmatprep.subr.mxu0 0.0
  %1400 = vmatpush1.msra.mxu0 0.0
  %1401 = vmatprep.subr.mxu0 0.0
  %1402 = vmatpush1.msra.mxu0 0.0
  %1403 = vmatprep.subr.mxu0 0.0
  %1404 = vmatpush1.msra.mxu0 0.0
  %1405 = vmatprep.subr.mxu0 0.0
  %1406 = vmatpush1.msra.mxu0 0.0
  %1407 = vmatprep.subr.mxu0 0.0
  %1408 = vmatpush1.msra.mxu0 0.0
  %1409 = vmatprep.subr.mxu0 0.0
  %1410 = vmatpush1.msra.mxu0 0.0
  %1411 = vmatprep.subr.mxu0 0.0
  %1412 = vmatpush1.msra.mxu0 0.0
  %1413 = vmatprep.subr.mxu0 0.0
  %1414 = vmatpush1.msra.mxu0 0.0
  %1415 = vmatprep.subr.mxu0 0.0
  %1416 = vmatpush1.msra.mxu0 0.0
  %1417 = vmatprep.subr.mxu0 0.0
  %1418 = vmatpush1.msra.mxu0 0.0
  %1419 = vmatprep.subr.mxu0 0.0
  %1420 = vmatpush1.msra.mxu0 0.0
  %1421 = vmatprep.subr.mxu0 0.0
  %1422 = vmatpush1.msra.mxu0 0.0
  %1423 = vmatprep.subr.mxu0 0.0
  %1424 = vmatpush1.msra.mxu0 0.0
  %1425 = vmatprep.subr.mxu0 0.0
  %1426 = vmatpush1.msra.mxu0 0.0
  %1427 = vmatprep.subr.mxu0 0.0
  %1428 = vmatpush1.msra.mxu0 0.0
  %1429 = vmatprep.subr.mxu0 0.0
  %1430 = vmatpush1.msra.mxu0 0.0
  %1431 = vmatprep.subr.mxu0 0.0
  %1432 = vmatpush1.msra.mxu0 0.0
  %1433 = vmatprep.subr.mxu0 0.0
  %1434 = vmatpush1.msra.mxu0 0.0
  %1435 = vmatprep.subr.mxu0 0.0
  %1436 = vmatpush1.msra.mxu0 0.0
  %1437 = vmatprep.mubr.f32.mxu0 0.0
  %1438 = vmatmul.mubr.f32.gmra.mrb[0].mxu0 %v1190
  %v1439 = vpop.f32.mrb[0].mxu0
  %v1440 = vadd.f32 %v1099, %v1439
  %v1441 = vpop.f32.mrb[0].mxu0
  %1442 = vmatprep.mubr.f32.mxu0 0.0
  %1443 = vmatmul.mubr.f32.gmra.mrb[0].mxu0 %v1193
  %v1444 = vpop.f32.mrb[0].mxu0
  %v1445 = vadd.f32 %v1104, %v1444
  %v1446 = vpop.f32.mrb[0].mxu0
  %1447 = vdwg.mxu0
  %v1448 = vmax.f32 %v1365, 0.0
  %v1449 = vmax.f32 %v1370, 0.0
  %v1450 = vmax.f32 %v1440, 0.0
  %v1451 = vmax.f32 %v1445, 0.0
  %1454 = vrot.lane.b32.xlu0 %v1450, 1
  %v1455 = vpop.permute.xlu0 %1454
  %1456 = vrot.lane.b32.xlu0 %v1451, 1
  %v1457 = vpop.permute.xlu0 %1456
  %v1460 = vsel %vm88, 0.0, %v1455
  %v1461 = vsel %vm88, 0.0, %v1457
  %v1462 = vsel %vm91, %v1460, 0.0
  %v1463 = vsel %vm91, %v1461, 0.0
  %v1464 = vld [vmem:[%s17] sm:$0x1]
  %v1465 = vld [vmem:[#allocation2] sm:$0x1]
  %1467 = vset.pattern.permute.xlu0 0
  %1468 = vperm.xlu0 %1467, %v1465
  %v1469 = vpop.permute.xlu0 %1468
  %v1471 = vlaneseq
  %v1472 = vshrl.u32 %v1471, 7
  %v1473 = vsub.s32 0, %v1472
  %v1474 = vrot.slane %v1469, %v1473
  %vm1475 = vcmask 261120
  %v1477 = vsel %vm1475, %v1464, 0
  %1479 = vmatprep.subr.mxu0 0.0
  %1480 = vmatpush1.msra.mxu0 %v1270
  %1481 = vmatprep.subr.mxu0 0.0
  %1482 = vmatpush1.msra.mxu0 %v1271
  %1483 = vmatprep.subr.mxu0 0.0
  %1484 = vmatpush1.msra.mxu0 %v1462
  %1485 = vmatprep.subr.mxu0 0.0
  %1486 = vmatpush1.msra.mxu0 %v1463
  %1487 = vmatprep.subr.mxu0 0.0
  %1488 = vmatpush1.msra.mxu0 0.0
  %1489 = vmatprep.subr.mxu0 0.0
  %1490 = vmatpush1.msra.mxu0 0.0
  %1491 = vmatprep.subr.mxu0 0.0
  %1492 = vmatpush1.msra.mxu0 0.0
  %1493 = vmatprep.subr.mxu0 0.0
  %1494 = vmatpush1.msra.mxu0 0.0
  %1495 = vmatprep.subr.mxu0 0.0
  %1496 = vmatpush1.msra.mxu0 0.0
  %1497 = vmatprep.subr.mxu0 0.0
  %1498 = vmatpush1.msra.mxu0 0.0
  %1499 = vmatprep.subr.mxu0 0.0
  %1500 = vmatpush1.msra.mxu0 0.0
  %1501 = vmatprep.subr.mxu0 0.0
  %1502 = vmatpush1.msra.mxu0 0.0
  %1503 = vmatprep.subr.mxu0 0.0
  %1504 = vmatpush1.msra.mxu0 0.0
  %1505 = vmatprep.subr.mxu0 0.0
  %1506 = vmatpush1.msra.mxu0 0.0
  %1507 = vmatprep.subr.mxu0 0.0
  %1508 = vmatpush1.msra.mxu0 0.0
  %1509 = vmatprep.subr.mxu0 0.0
  %1510 = vmatpush1.msra.mxu0 0.0
  %1511 = vmatprep.subr.mxu0 0.0
  %1512 = vmatpush1.msra.mxu0 0.0
  %1513 = vmatprep.subr.mxu0 0.0
  %1514 = vmatpush1.msra.mxu0 0.0
  %1515 = vmatprep.subr.mxu0 0.0
  %1516 = vmatpush1.msra.mxu0 0.0
  %1517 = vmatprep.subr.mxu0 0.0
  %1518 = vmatpush1.msra.mxu0 0.0
  %1519 = vmatprep.subr.mxu0 0.0
  %1520 = vmatpush1.msra.mxu0 0.0
  %1521 = vmatprep.subr.mxu0 0.0
  %1522 = vmatpush1.msra.mxu0 0.0
  %1523 = vmatprep.subr.mxu0 0.0
  %1524 = vmatpush1.msra.mxu0 0.0
  %1525 = vmatprep.subr.mxu0 0.0
  %1526 = vmatpush1.msra.mxu0 0.0
  %1527 = vmatprep.subr.mxu0 0.0
  %1528 = vmatpush1.msra.mxu0 0.0
  %1529 = vmatprep.subr.mxu0 0.0
  %1530 = vmatpush1.msra.mxu0 0.0
  %1531 = vmatprep.subr.mxu0 0.0
  %1532 = vmatpush1.msra.mxu0 0.0
  %1533 = vmatprep.subr.mxu0 0.0
  %1534 = vmatpush1.msra.mxu0 0.0
  %1535 = vmatprep.subr.mxu0 0.0
  %1536 = vmatpush1.msra.mxu0 0.0
  %1537 = vmatprep.subr.mxu0 0.0
  %1538 = vmatpush1.msra.mxu0 0.0
  %1539 = vmatprep.subr.mxu0 0.0
  %1540 = vmatpush1.msra.mxu0 0.0
  %1541 = vmatprep.subr.mxu0 0.0
  %1542 = vmatpush1.msra.mxu0 0.0
  %1543 = vmatprep.mubr.f32.mxu0 0.0
  %1544 = vmatmul.mubr.f32.gmra.mrb[0].mxu0 %v1477
  %v1545 = vpop.f32.mrb[0].mxu0
  %v1546 = vadd.f32 %v1474, %v1545
  %v1547 = vpop.f32.mrb[0].mxu0
  %1548 = vdwg.mxu0
  %v1549 = vld [vmem:[%s18] sm:$0x1]
  %v1551 = vsel %vm1475, %v1549, 0
  %1553 = vmatprep.subr.mxu0 0.0
  %1554 = vmatpush1.msra.mxu0 %v1270
  %1555 = vmatprep.subr.mxu0 0.0
  %1556 = vmatpush1.msra.mxu0 %v1271
  %1557 = vmatprep.subr.mxu0 0.0
  %1558 = vmatpush1.msra.mxu0 %v1272
  %1559 = vmatprep.subr.mxu0 0.0
  %1560 = vmatpush1.msra.mxu0 %v1273
  %1561 = vmatprep.subr.mxu0 0.0
  %1562 = vmatpush1.msra.mxu0 0.0
  %1563 = vmatprep.subr.mxu0 0.0
  %1564 = vmatpush1.msra.mxu0 0.0
  %1565 = vmatprep.subr.mxu0 0.0
  %1566 = vmatpush1.msra.mxu0 0.0
  %1567 = vmatprep.subr.mxu0 0.0
  %1568 = vmatpush1.msra.mxu0 0.0
  %1569 = vmatprep.subr.mxu0 0.0
  %1570 = vmatpush1.msra.mxu0 0.0
  %1571 = vmatprep.subr.mxu0 0.0
  %1572 = vmatpush1.msra.mxu0 0.0
  %1573 = vmatprep.subr.mxu0 0.0
  %1574 = vmatpush1.msra.mxu0 0.0
  %1575 = vmatprep.subr.mxu0 0.0
  %1576 = vmatpush1.msra.mxu0 0.0
  %1577 = vmatprep.subr.mxu0 0.0
  %1578 = vmatpush1.msra.mxu0 0.0
  %1579 = vmatprep.subr.mxu0 0.0
  %1580 = vmatpush1.msra.mxu0 0.0
  %1581 = vmatprep.subr.mxu0 0.0
  %1582 = vmatpush1.msra.mxu0 0.0
  %1583 = vmatprep.subr.mxu0 0.0
  %1584 = vmatpush1.msra.mxu0 0.0
  %1585 = vmatprep.subr.mxu0 0.0
  %1586 = vmatpush1.msra.mxu0 0.0
  %1587 = vmatprep.subr.mxu0 0.0
  %1588 = vmatpush1.msra.mxu0 0.0
  %1589 = vmatprep.subr.mxu0 0.0
  %1590 = vmatpush1.msra.mxu0 0.0
  %1591 = vmatprep.subr.mxu0 0.0
  %1592 = vmatpush1.msra.mxu0 0.0
  %1593 = vmatprep.subr.mxu0 0.0
  %1594 = vmatpush1.msra.mxu0 0.0
  %1595 = vmatprep.subr.mxu0 0.0
  %1596 = vmatpush1.msra.mxu0 0.0
  %1597 = vmatprep.subr.mxu0 0.0
  %1598 = vmatpush1.msra.mxu0 0.0
  %1599 = vmatprep.subr.mxu0 0.0
  %1600 = vmatpush1.msra.mxu0 0.0
  %1601 = vmatprep.subr.mxu0 0.0
  %1602 = vmatpush1.msra.mxu0 0.0
  %1603 = vmatprep.subr.mxu0 0.0
  %1604 = vmatpush1.msra.mxu0 0.0
  %1605 = vmatprep.subr.mxu0 0.0
  %1606 = vmatpush1.msra.mxu0 0.0
  %1607 = vmatprep.subr.mxu0 0.0
  %1608 = vmatpush1.msra.mxu0 0.0
  %1609 = vmatprep.subr.mxu0 0.0
  %1610 = vmatpush1.msra.mxu0 0.0
  %1611 = vmatprep.subr.mxu0 0.0
  %1612 = vmatpush1.msra.mxu0 0.0
  %1613 = vmatprep.subr.mxu0 0.0
  %1614 = vmatpush1.msra.mxu0 0.0
  %1615 = vmatprep.subr.mxu0 0.0
  %1616 = vmatpush1.msra.mxu0 0.0
  %1617 = vmatprep.mubr.f32.mxu0 0.0
  %1618 = vmatmul.mubr.f32.gmra.mrb[0].mxu0 %v1551
  %v1619 = vpop.f32.mrb[0].mxu0
  %v1620 = vadd.f32 %v1474, %v1619
  %v1621 = vpop.f32.mrb[0].mxu0
  %1622 = vdwg.mxu0
  %1623 = vmatprep.subr.mxu0 0.0
  %1624 = vmatpush1.msra.mxu0 %v1272
  %1625 = vmatprep.subr.mxu0 0.0
  %1626 = vmatpush1.msra.mxu0 %v1273
  %1627 = vmatprep.subr.mxu0 0.0
  %1628 = vmatpush1.msra.mxu0 %v1270
  %1629 = vmatprep.subr.mxu0 0.0
  %1630 = vmatpush1.msra.mxu0 %v1271
  %1631 = vmatprep.subr.mxu0 0.0
  %1632 = vmatpush1.msra.mxu0 0.0
  %1633 = vmatprep.subr.mxu0 0.0
  %1634 = vmatpush1.msra.mxu0 0.0
  %1635 = vmatprep.subr.mxu0 0.0
  %1636 = vmatpush1.msra.mxu0 0.0
  %1637 = vmatprep.subr.mxu0 0.0
  %1638 = vmatpush1.msra.mxu0 0.0
  %1639 = vmatprep.subr.mxu0 0.0
  %1640 = vmatpush1.msra.mxu0 0.0
  %1641 = vmatprep.subr.mxu0 0.0
  %1642 = vmatpush1.msra.mxu0 0.0
  %1643 = vmatprep.subr.mxu0 0.0
  %1644 = vmatpush1.msra.mxu0 0.0
  %1645 = vmatprep.subr.mxu0 0.0
  %1646 = vmatpush1.msra.mxu0 0.0
  %1647 = vmatprep.subr.mxu0 0.0
  %1648 = vmatpush1.msra.mxu0 0.0
  %1649 = vmatprep.subr.mxu0 0.0
  %1650 = vmatpush1.msra.mxu0 0.0
  %1651 = vmatprep.subr.mxu0 0.0
  %1652 = vmatpush1.msra.mxu0 0.0
  %1653 = vmatprep.subr.mxu0 0.0
  %1654 = vmatpush1.msra.mxu0 0.0
  %1655 = vmatprep.subr.mxu0 0.0
  %1656 = vmatpush1.msra.mxu0 0.0
  %1657 = vmatprep.subr.mxu0 0.0
  %1658 = vmatpush1.msra.mxu0 0.0
  %1659 = vmatprep.subr.mxu0 0.0
  %1660 = vmatpush1.msra.mxu0 0.0
  %1661 = vmatprep.subr.mxu0 0.0
  %1662 = vmatpush1.msra.mxu0 0.0
  %1663 = vmatprep.subr.mxu0 0.0
  %1664 = vmatpush1.msra.mxu0 0.0
  %1665 = vmatprep.subr.mxu0 0.0
  %1666 = vmatpush1.msra.mxu0 0.0
  %1667 = vmatprep.subr.mxu0 0.0
  %1668 = vmatpush1.msra.mxu0 0.0
  %1669 = vmatprep.subr.mxu0 0.0
  %1670 = vmatpush1.msra.mxu0 0.0
  %1671 = vmatprep.subr.mxu0 0.0
  %1672 = vmatpush1.msra.mxu0 0.0
  %1673 = vmatprep.subr.mxu0 0.0
  %1674 = vmatpush1.msra.mxu0 0.0
  %1675 = vmatprep.subr.mxu0 0.0
  %1676 = vmatpush1.msra.mxu0 0.0
  %1677 = vmatprep.subr.mxu0 0.0
  %1678 = vmatpush1.msra.mxu0 0.0
  %1679 = vmatprep.subr.mxu0 0.0
  %1680 = vmatpush1.msra.mxu0 0.0
  %1681 = vmatprep.subr.mxu0 0.0
  %1682 = vmatpush1.msra.mxu0 0.0
  %1683 = vmatprep.subr.mxu0 0.0
  %1684 = vmatpush1.msra.mxu0 0.0
  %1685 = vmatprep.subr.mxu0 0.0
  %1686 = vmatpush1.msra.mxu0 0.0
  %1687 = vmatprep.mubr.f32.mxu0 0.0
  %1688 = vmatmul.mubr.f32.gmra.mrb[0].mxu0 %v1477
  %v1689 = vpop.f32.mrb[0].mxu0
  %v1690 = vadd.f32 %v1474, %v1689
  %v1691 = vpop.f32.mrb[0].mxu0
  %1692 = vdwg.mxu0
  %1693 = vmatprep.subr.mxu0 0.0
  %1694 = vmatpush1.msra.mxu0 %v1272
  %1695 = vmatprep.subr.mxu0 0.0
  %1696 = vmatpush1.msra.mxu0 %v1273
  %1697 = vmatprep.subr.mxu0 0.0
  %1698 = vmatpush1.msra.mxu0 %v1448
  %1699 = vmatprep.subr.mxu0 0.0
  %1700 = vmatpush1.msra.mxu0 %v1449
  %1701 = vmatprep.subr.mxu0 0.0
  %1702 = vmatpush1.msra.mxu0 0.0
  %1703 = vmatprep.subr.mxu0 0.0
  %1704 = vmatpush1.msra.mxu0 0.0
  %1705 = vmatprep.subr.mxu0 0.0
  %1706 = vmatpush1.msra.mxu0 0.0
  %1707 = vmatprep.subr.mxu0 0.0
  %1708 = vmatpush1.msra.mxu0 0.0
  %1709 = vmatprep.subr.mxu0 0.0
  %1710 = vmatpush1.msra.mxu0 0.0
  %1711 = vmatprep.subr.mxu0 0.0
  %1712 = vmatpush1.msra.mxu0 0.0
  %1713 = vmatprep.subr.mxu0 0.0
  %1714 = vmatpush1.msra.mxu0 0.0
  %1715 = vmatprep.subr.mxu0 0.0
  %1716 = vmatpush1.msra.mxu0 0.0
  %1717 = vmatprep.subr.mxu0 0.0
  %1718 = vmatpush1.msra.mxu0 0.0
  %1719 = vmatprep.subr.mxu0 0.0
  %1720 = vmatpush1.msra.mxu0 0.0
  %1721 = vmatprep.subr.mxu0 0.0
  %1722 = vmatpush1.msra.mxu0 0.0
  %1723 = vmatprep.subr.mxu0 0.0
  %1724 = vmatpush1.msra.mxu0 0.0
  %1725 = vmatprep.subr.mxu0 0.0
  %1726 = vmatpush1.msra.mxu0 0.0
  %1727 = vmatprep.subr.mxu0 0.0
  %1728 = vmatpush1.msra.mxu0 0.0
  %1729 = vmatprep.subr.mxu0 0.0
  %1730 = vmatpush1.msra.mxu0 0.0
  %1731 = vmatprep.subr.mxu0 0.0
  %1732 = vmatpush1.msra.mxu0 0.0
  %1733 = vmatprep.subr.mxu0 0.0
  %1734 = vmatpush1.msra.mxu0 0.0
  %1735 = vmatprep.subr.mxu0 0.0
  %1736 = vmatpush1.msra.mxu0 0.0
  %1737 = vmatprep.subr.mxu0 0.0
  %1738 = vmatpush1.msra.mxu0 0.0
  %1739 = vmatprep.subr.mxu0 0.0
  %1740 = vmatpush1.msra.mxu0 0.0
  %1741 = vmatprep.subr.mxu0 0.0
  %1742 = vmatpush1.msra.mxu0 0.0
  %1743 = vmatprep.subr.mxu0 0.0
  %1744 = vmatpush1.msra.mxu0 0.0
  %1745 = vmatprep.subr.mxu0 0.0
  %1746 = vmatpush1.msra.mxu0 0.0
  %1747 = vmatprep.subr.mxu0 0.0
  %1748 = vmatpush1.msra.mxu0 0.0
  %1749 = vmatprep.subr.mxu0 0.0
  %1750 = vmatpush1.msra.mxu0 0.0
  %1751 = vmatprep.subr.mxu0 0.0
  %1752 = vmatpush1.msra.mxu0 0.0
  %1753 = vmatprep.subr.mxu0 0.0
  %1754 = vmatpush1.msra.mxu0 0.0
  %1755 = vmatprep.subr.mxu0 0.0
  %1756 = vmatpush1.msra.mxu0 0.0
  %1757 = vmatprep.mubr.f32.mxu0 0.0
  %1758 = vmatmul.mubr.f32.gmra.mrb[0].mxu0 %v1551
  %v1759 = vpop.f32.mrb[0].mxu0
  %v1760 = vadd.f32 %v1474, %v1759
  %v1761 = vpop.f32.mrb[0].mxu0
  %1762 = vdwg.mxu0
  %1763 = vmatprep.subr.mxu0 0.0
  %1764 = vmatpush1.msra.mxu0 %v1448
  %1765 = vmatprep.subr.mxu0 0.0
  %1766 = vmatpush1.msra.mxu0 %v1449
  %1767 = vmatprep.subr.mxu0 0.0
  %1768 = vmatpush1.msra.mxu0 %v1272
  %1769 = vmatprep.subr.mxu0 0.0
  %1770 = vmatpush1.msra.mxu0 %v1273
  %1771 = vmatprep.subr.mxu0 0.0
  %1772 = vmatpush1.msra.mxu0 0.0
  %1773 = vmatprep.subr.mxu0 0.0
  %1774 = vmatpush1.msra.mxu0 0.0
  %1775 = vmatprep.subr.mxu0 0.0
  %1776 = vmatpush1.msra.mxu0 0.0
  %1777 = vmatprep.subr.mxu0 0.0
  %1778 = vmatpush1.msra.mxu0 0.0
  %1779 = vmatprep.subr.mxu0 0.0
  %1780 = vmatpush1.msra.mxu0 0.0
  %1781 = vmatprep.subr.mxu0 0.0
  %1782 = vmatpush1.msra.mxu0 0.0
  %1783 = vmatprep.subr.mxu0 0.0
  %1784 = vmatpush1.msra.mxu0 0.0
  %1785 = vmatprep.subr.mxu0 0.0
  %1786 = vmatpush1.msra.mxu0 0.0
  %1787 = vmatprep.subr.mxu0 0.0
  %1788 = vmatpush1.msra.mxu0 0.0
  %1789 = vmatprep.subr.mxu0 0.0
  %1790 = vmatpush1.msra.mxu0 0.0
  %1791 = vmatprep.subr.mxu0 0.0
  %1792 = vmatpush1.msra.mxu0 0.0
  %1793 = vmatprep.subr.mxu0 0.0
  %1794 = vmatpush1.msra.mxu0 0.0
  %1795 = vmatprep.subr.mxu0 0.0
  %1796 = vmatpush1.msra.mxu0 0.0
  %1797 = vmatprep.subr.mxu0 0.0
  %1798 = vmatpush1.msra.mxu0 0.0
  %1799 = vmatprep.subr.mxu0 0.0
  %1800 = vmatpush1.msra.mxu0 0.0
  %1801 = vmatprep.subr.mxu0 0.0
  %1802 = vmatpush1.msra.mxu0 0.0
  %1803 = vmatprep.subr.mxu0 0.0
  %1804 = vmatpush1.msra.mxu0 0.0
  %1805 = vmatprep.subr.mxu0 0.0
  %1806 = vmatpush1.msra.mxu0 0.0
  %1807 = vmatprep.subr.mxu0 0.0
  %1808 = vmatpush1.msra.mxu0 0.0
  %1809 = vmatprep.subr.mxu0 0.0
  %1810 = vmatpush1.msra.mxu0 0.0
  %1811 = vmatprep.subr.mxu0 0.0
  %1812 = vmatpush1.msra.mxu0 0.0
  %1813 = vmatprep.subr.mxu0 0.0
  %1814 = vmatpush1.msra.mxu0 0.0
  %1815 = vmatprep.subr.mxu0 0.0
  %1816 = vmatpush1.msra.mxu0 0.0
  %1817 = vmatprep.subr.mxu0 0.0
  %1818 = vmatpush1.msra.mxu0 0.0
  %1819 = vmatprep.subr.mxu0 0.0
  %1820 = vmatpush1.msra.mxu0 0.0
  %1821 = vmatprep.subr.mxu0 0.0
  %1822 = vmatpush1.msra.mxu0 0.0
  %1823 = vmatprep.subr.mxu0 0.0
  %1824 = vmatpush1.msra.mxu0 0.0
  %1825 = vmatprep.subr.mxu0 0.0
  %1826 = vmatpush1.msra.mxu0 0.0
  %1827 = vmatprep.mubr.f32.mxu0 0.0
  %1828 = vmatmul.mubr.f32.gmra.mrb[0].mxu0 %v1477
  %v1829 = vpop.f32.mrb[0].mxu0
  %v1830 = vadd.f32 %v1474, %v1829
  %v1831 = vpop.f32.mrb[0].mxu0
  %1832 = vdwg.mxu0
  %1833 = vmatprep.subr.mxu0 0.0
  %1834 = vmatpush1.msra.mxu0 %v1448
  %1835 = vmatprep.subr.mxu0 0.0
  %1836 = vmatpush1.msra.mxu0 %v1449
  %1837 = vmatprep.subr.mxu0 0.0
  %1838 = vmatpush1.msra.mxu0 %v1450
  %1839 = vmatprep.subr.mxu0 0.0
  %1840 = vmatpush1.msra.mxu0 %v1451
  %1841 = vmatprep.subr.mxu0 0.0
  %1842 = vmatpush1.msra.mxu0 0.0
  %1843 = vmatprep.subr.mxu0 0.0
  %1844 = vmatpush1.msra.mxu0 0.0
  %1845 = vmatprep.subr.mxu0 0.0
  %1846 = vmatpush1.msra.mxu0 0.0
  %1847 = vmatprep.subr.mxu0 0.0
  %1848 = vmatpush1.msra.mxu0 0.0
  %1849 = vmatprep.subr.mxu0 0.0
  %1850 = vmatpush1.msra.mxu0 0.0
  %1851 = vmatprep.subr.mxu0 0.0
  %1852 = vmatpush1.msra.mxu0 0.0
  %1853 = vmatprep.subr.mxu0 0.0
  %1854 = vmatpush1.msra.mxu0 0.0
  %1855 = vmatprep.subr.mxu0 0.0
  %1856 = vmatpush1.msra.mxu0 0.0
  %1857 = vmatprep.subr.mxu0 0.0
  %1858 = vmatpush1.msra.mxu0 0.0
  %1859 = vmatprep.subr.mxu0 0.0
  %1860 = vmatpush1.msra.mxu0 0.0
  %1861 = vmatprep.subr.mxu0 0.0
  %1862 = vmatpush1.msra.mxu0 0.0
  %1863 = vmatprep.subr.mxu0 0.0
  %1864 = vmatpush1.msra.mxu0 0.0
  %1865 = vmatprep.subr.mxu0 0.0
  %1866 = vmatpush1.msra.mxu0 0.0
  %1867 = vmatprep.subr.mxu0 0.0
  %1868 = vmatpush1.msra.mxu0 0.0
  %1869 = vmatprep.subr.mxu0 0.0
  %1870 = vmatpush1.msra.mxu0 0.0
  %1871 = vmatprep.subr.mxu0 0.0
  %1872 = vmatpush1.msra.mxu0 0.0
  %1873 = vmatprep.subr.mxu0 0.0
  %1874 = vmatpush1.msra.mxu0 0.0
  %1875 = vmatprep.subr.mxu0 0.0
  %1876 = vmatpush1.msra.mxu0 0.0
  %1877 = vmatprep.subr.mxu0 0.0
  %1878 = vmatpush1.msra.mxu0 0.0
  %1879 = vmatprep.subr.mxu0 0.0
  %1880 = vmatpush1.msra.mxu0 0.0
  %1881 = vmatprep.subr.mxu0 0.0
  %1882 = vmatpush1.msra.mxu0 0.0
  %1883 = vmatprep.subr.mxu0 0.0
  %1884 = vmatpush1.msra.mxu0 0.0
  %1885 = vmatprep.subr.mxu0 0.0
  %1886 = vmatpush1.msra.mxu0 0.0
  %1887 = vmatprep.subr.mxu0 0.0
  %1888 = vmatpush1.msra.mxu0 0.0
  %1889 = vmatprep.subr.mxu0 0.0
  %1890 = vmatpush1.msra.mxu0 0.0
  %1891 = vmatprep.subr.mxu0 0.0
  %1892 = vmatpush1.msra.mxu0 0.0
  %1893 = vmatprep.subr.mxu0 0.0
  %1894 = vmatpush1.msra.mxu0 0.0
  %1895 = vmatprep.subr.mxu0 0.0
  %1896 = vmatpush1.msra.mxu0 0.0
  %1897 = vmatprep.mubr.f32.mxu0 0.0
  %1898 = vmatmul.mubr.f32.gmra.mrb[0].mxu0 %v1551
  %v1899 = vpop.f32.mrb[0].mxu0
  %v1900 = vadd.f32 %v1474, %v1899
  %v1901 = vpop.f32.mrb[0].mxu0
  %1902 = vdwg.mxu0
  %1905 = vrot.lane.b32.xlu0 %v1270, 127
  %v1906 = vpop.permute.xlu0 %1905
  %1907 = vrot.lane.b32.xlu0 %v1271, 127
  %v1908 = vpop.permute.xlu0 %1907
  %v1911 = vsel %vm96, %v1906, 0.0
  %v1912 = vsel %vm96, %v1908, 0.0
  %v1913 = vsel %vm99, %v1911, 0.0
  %v1914 = vsel %vm99, %v1912, 0.0
  %1915 = vmatprep.subr.mxu0 0.0
  %1916 = vmatpush1.msra.mxu0 %v1450
  %1917 = vmatprep.subr.mxu0 0.0
  %1918 = vmatpush1.msra.mxu0 %v1451
  %1919 = vmatprep.subr.mxu0 0.0
  %1920 = vmatpush1.msra.mxu0 %v1448
  %1921 = vmatprep.subr.mxu0 0.0
  %1922 = vmatpush1.msra.mxu0 %v1449
  %1923 = vmatprep.subr.mxu0 0.0
  %1924 = vmatpush1.msra.mxu0 0.0
  %1925 = vmatprep.subr.mxu0 0.0
  %1926 = vmatpush1.msra.mxu0 0.0
  %1927 = vmatprep.subr.mxu0 0.0
  %1928 = vmatpush1.msra.mxu0 0.0
  %1929 = vmatprep.subr.mxu0 0.0
  %1930 = vmatpush1.msra.mxu0 0.0
  %1931 = vmatprep.subr.mxu0 0.0
  %1932 = vmatpush1.msra.mxu0 0.0
  %1933 = vmatprep.subr.mxu0 0.0
  %1934 = vmatpush1.msra.mxu0 0.0
  %1935 = vmatprep.subr.mxu0 0.0
  %1936 = vmatpush1.msra.mxu0 0.0
  %1937 = vmatprep.subr.mxu0 0.0
  %1938 = vmatpush1.msra.mxu0 0.0
  %1939 = vmatprep.subr.mxu0 0.0
  %1940 = vmatpush1.msra.mxu0 0.0
  %1941 = vmatprep.subr.mxu0 0.0
  %1942 = vmatpush1.msra.mxu0 0.0
  %1943 = vmatprep.subr.mxu0 0.0
  %1944 = vmatpush1.msra.mxu0 0.0
  %1945 = vmatprep.subr.mxu0 0.0
  %1946 = vmatpush1.msra.mxu0 0.0
  %1947 = vmatprep.subr.mxu0 0.0
  %1948 = vmatpush1.msra.mxu0 0.0
  %1949 = vmatprep.subr.mxu0 0.0
  %1950 = vmatpush1.msra.mxu0 0.0
  %1951 = vmatprep.subr.mxu0 0.0
  %1952 = vmatpush1.msra.mxu0 0.0
  %1953 = vmatprep.subr.mxu0 0.0
  %1954 = vmatpush1.msra.mxu0 0.0
  %1955 = vmatprep.subr.mxu0 0.0
  %1956 = vmatpush1.msra.mxu0 0.0
  %1957 = vmatprep.subr.mxu0 0.0
  %1958 = vmatpush1.msra.mxu0 0.0
  %1959 = vmatprep.subr.mxu0 0.0
  %1960 = vmatpush1.msra.mxu0 0.0
  %1961 = vmatprep.subr.mxu0 0.0
  %1962 = vmatpush1.msra.mxu0 0.0
  %1963 = vmatprep.subr.mxu0 0.0
  %1964 = vmatpush1.msra.mxu0 0.0
  %1965 = vmatprep.subr.mxu0 0.0
  %1966 = vmatpush1.msra.mxu0 0.0
  %1967 = vmatprep.subr.mxu0 0.0
  %1968 = vmatpush1.msra.mxu0 0.0
  %1969 = vmatprep.subr.mxu0 0.0
  %1970 = vmatpush1.msra.mxu0 0.0
  %1971 = vmatprep.subr.mxu0 0.0
  %1972 = vmatpush1.msra.mxu0 0.0
  %1973 = vmatprep.subr.mxu0 0.0
  %1974 = vmatpush1.msra.mxu0 0.0
  %1975 = vmatprep.subr.mxu0 0.0
  %1976 = vmatpush1.msra.mxu0 0.0
  %1977 = vmatprep.subr.mxu0 0.0
  %1978 = vmatpush1.msra.mxu0 0.0
  %1979 = vmatprep.mubr.f32.mxu0 0.0
  %1980 = vmatmul.mubr.f32.gmra.mrb[0].mxu0 %v1477
  %v1981 = vpop.f32.mrb[0].mxu0
  %v1982 = vadd.f32 %v1474, %v1981
  %v1983 = vpop.f32.mrb[0].mxu0
  %1984 = vdwg.mxu0
  %1985 = vmatprep.subr.mxu0 0.0
  %1986 = vmatpush1.msra.mxu0 %v1450
  %1987 = vmatprep.subr.mxu0 0.0
  %1988 = vmatpush1.msra.mxu0 %v1451
  %1989 = vmatprep.subr.mxu0 0.0
  %1990 = vmatpush1.msra.mxu0 %v1913
  %1991 = vmatprep.subr.mxu0 0.0
  %1992 = vmatpush1.msra.mxu0 %v1914
  %1993 = vmatprep.subr.mxu0 0.0
  %1994 = vmatpush1.msra.mxu0 0.0
  %1995 = vmatprep.subr.mxu0 0.0
  %1996 = vmatpush1.msra.mxu0 0.0
  %1997 = vmatprep.subr.mxu0 0.0
  %1998 = vmatpush1.msra.mxu0 0.0
  %1999 = vmatprep.subr.mxu0 0.0
  %2000 = vmatpush1.msra.mxu0 0.0
  %2001 = vmatprep.subr.mxu0 0.0
  %2002 = vmatpush1.msra.mxu0 0.0
  %2003 = vmatprep.subr.mxu0 0.0
  %2004 = vmatpush1.msra.mxu0 0.0
  %2005 = vmatprep.subr.mxu0 0.0
  %2006 = vmatpush1.msra.mxu0 0.0
  %2007 = vmatprep.subr.mxu0 0.0
  %2008 = vmatpush1.msra.mxu0 0.0
  %2009 = vmatprep.subr.mxu0 0.0
  %2010 = vmatpush1.msra.mxu0 0.0
  %2011 = vmatprep.subr.mxu0 0.0
  %2012 = vmatpush1.msra.mxu0 0.0
  %2013 = vmatprep.subr.mxu0 0.0
  %2014 = vmatpush1.msra.mxu0 0.0
  %2015 = vmatprep.subr.mxu0 0.0
  %2016 = vmatpush1.msra.mxu0 0.0
  %2017 = vmatprep.subr.mxu0 0.0
  %2018 = vmatpush1.msra.mxu0 0.0
  %2019 = vmatprep.subr.mxu0 0.0
  %2020 = vmatpush1.msra.mxu0 0.0
  %2021 = vmatprep.subr.mxu0 0.0
  %2022 = vmatpush1.msra.mxu0 0.0
  %2023 = vmatprep.subr.mxu0 0.0
  %2024 = vmatpush1.msra.mxu0 0.0
  %2025 = vmatprep.subr.mxu0 0.0
  %2026 = vmatpush1.msra.mxu0 0.0
  %2027 = vmatprep.subr.mxu0 0.0
  %2028 = vmatpush1.msra.mxu0 0.0
  %2029 = vmatprep.subr.mxu0 0.0
  %2030 = vmatpush1.msra.mxu0 0.0
  %2031 = vmatprep.subr.mxu0 0.0
  %2032 = vmatpush1.msra.mxu0 0.0
  %2033 = vmatprep.subr.mxu0 0.0
  %2034 = vmatpush1.msra.mxu0 0.0
  %2035 = vmatprep.subr.mxu0 0.0
  %2036 = vmatpush1.msra.mxu0 0.0
  %2037 = vmatprep.subr.mxu0 0.0
  %2038 = vmatpush1.msra.mxu0 0.0
  %2039 = vmatprep.subr.mxu0 0.0
  %2040 = vmatpush1.msra.mxu0 0.0
  %2041 = vmatprep.subr.mxu0 0.0
  %2042 = vmatpush1.msra.mxu0 0.0
  %2043 = vmatprep.subr.mxu0 0.0
  %2044 = vmatpush1.msra.mxu0 0.0
  %2045 = vmatprep.subr.mxu0 0.0
  %2046 = vmatpush1.msra.mxu0 0.0
  %2047 = vmatprep.subr.mxu0 0.0
  %2048 = vmatpush1.msra.mxu0 0.0
  %2049 = vmatprep.mubr.f32.mxu0 0.0
  %2050 = vmatmul.mubr.f32.gmra.mrb[0].mxu0 %v1551
  %v2051 = vpop.f32.mrb[0].mxu0
  %v2052 = vadd.f32 %v1474, %v2051
  %v2053 = vpop.f32.mrb[0].mxu0
  %2054 = vdwg.mxu0
  %2056 = vrot.lane.b32.xlu0 %v1620, 16
  %v2057 = vpop.permute.xlu0 %2056
  %2060 = vrot.lane.b32.xlu0 %v1690, 32
  %v2061 = vpop.permute.xlu0 %2060
  %2064 = vrot.lane.b32.xlu0 %v1760, 48
  %v2065 = vpop.permute.xlu0 %2064
  %2068 = vrot.lane.b32.xlu0 %v1830, 64
  %v2069 = vpop.permute.xlu0 %2068
  %2072 = vrot.lane.b32.xlu0 %v1900, 80
  %v2073 = vpop.permute.xlu0 %2072
  %2076 = vrot.lane.b32.xlu0 %v1982, 96
  %v2077 = vpop.permute.xlu0 %2076
  %2080 = vrot.lane.b32.xlu0 %v2052, 112
  %v2081 = vpop.permute.xlu0 %2080
  %v2083 = vsel %vm377, %v1546, %v2057
  %v2084 = vsel %vm1475, %v2083, %v2061
  %vm2085 = vcmask 392192
  %v2086 = vsel %vm2085, %v2084, %v2065
  %v2087 = vsel %vm861, %v2086, %v2069
  %vm2088 = vcmask 654336
  %v2089 = vsel %vm2088, %v2087, %v2073
  %v2090 = vsel %vm289, %v2089, %v2077
  %vm2091 = vcmask 916480
  %v2092 = vsel %vm2091, %v2090, %v2081
  %2093 = vst [vmem:[%s20] sm:$0x1] %v2092
  // Predicated region
  $region82: #{decoder_forward.1} parent=0 // pred_check
    _
  $region83: #{decoder_forward.1} parent=0 // pred_check_branch
    %2095 = sbr.rel (0) target = $region85
  $region84: #{decoder_forward.1} parent=0 // pred_region
    _
  $region85: #{decoder_forward.1} parent=0 // pred_fallthru
    _
  // Predicated region
  $region86: #{decoder_forward.1} parent=0 // pred_check
    _
  $region87: #{decoder_forward.1} parent=0 // pred_check_branch
    %2097 = sbr.rel (0) target = $region89
  $region88: #{decoder_forward.1} parent=0 // pred_region
    _
  $region89: #{decoder_forward.1} parent=0 // pred_fallthru
    _

</llo_original>
